<compile_context>
chip_gen: v6e
topology: v6e:2x2x1
jax: 0.10.0
libtpu: 0.0.40
codegen_flags: <defaults>
</compile_context>

<pallas_src>
import functools

import jax
import jax.numpy as jnp
import numpy as np
from jax import lax
from jax.experimental import pallas as pl
from jax.experimental.pallas import tpu as pltpu


def _double_conv_kernel(x_ref,
                        w1_ref, s1_ref, t1_ref,
                        w2_ref, s2_ref, t2_ref,
                        w3_ref, s3_ref, t3_ref,
                        o_ref,
                        pad0, pad1, pad2,
                        *, B, H, S, fold_k):
    """Fused (Conv3x3 -> folded BN -> ReLU) x 3 for B images stacked along M.

    Layouts (channels lane-packed into the last dim):
      x_ref  : (B, H, W*C_in)   input images
      wL_ref : (3*W*CinL, W*C)  banded weights, dy-major along K (dx taps and
                                the Cin->Cout contraction folded into the band)
      sL/tL  : (1, W*C)         folded BatchNorm scale / bias, tiled over W
      o_ref  : (B, H, W*C)      layer-3 output
      padL   : f32 VMEM scratch (B*S + 16, lanes).  Image b's interior lives at
               rows [8 + b*S, 8 + b*S + H) (sublane-aligned); the 8 rows in
               between are the zero halo implementing padding=1 vertically and
               isolating neighbouring images.  Stacked acc row r = b*S + h reads
               scratch rows r+7 .. r+9, i.e. image rows h-1, h, h+1 with the
               halo standing in for the zero pad.
    """
    M = B * S

    # Re-zero only the fixed halo regions (aligned 8-row tiles); the interiors
    # are fully overwritten below and junk acc rows are never stored.
    # Deliberately NOT "@pl.when(program_id(0) == 0)": with a 'parallel' grid
    # axis each v7x TensorCore has its own scratch and only one would see step 0.
    for buf in (pad0, pad1, pad2):
        z = jnp.zeros((8, buf.shape[1]), buf.dtype)
        buf[0:8, :] = z
        for b in range(B):
            buf[8 + b * S + H:8 + (b + 1) * S, :] = z

    # Scatter the B inputs into their sublane-aligned interior slots.
    for b in range(B):
        pad0[8 + b * S:8 + b * S + H, :] = x_ref[b].astype(pad0.dtype)

    def conv_bn_relu(src, w_ref, s_ref, t_ref):
        kk, n_out = w_ref.shape
        k = kk // 3
        # Matmul operands take the weights' dtype (bf16 on v6e/v7x -> single
        # MXU pass; f32 for exact PyTorch numerics); accumulation stays f32.
        if fold_k and k % 128 == 0:
            # One MXU push with K = 3k (= 384 here) fills the 256-deep MXU.
            lhs = jnp.concatenate(
                [src[7 + dy:7 + dy + M, :] for dy in range(3)], axis=1)
            acc = jnp.dot(lhs.astype(w_ref.dtype), w_ref[...],
                          preferred_element_type=jnp.float32)
        else:
            # 3 pushes of K = k (layer 1: k=64 pieces are not 128-lane aligned
            # for a lane concat; K<=128 also already matches the v5e MXU depth).
            acc = jnp.zeros((M, n_out), jnp.float32)
            for dy in range(3):
                acc = acc + jnp.dot(
                    src[7 + dy:7 + dy + M, :].astype(w_ref.dtype),
                    w_ref[dy * k:(dy + 1) * k, :],
                    preferred_element_type=jnp.float32)
        # Folded BatchNorm + ReLU in f32 on the lane-dense (M, W*C) tile.
        return jnp.maximum(acc * s_ref[...] + t_ref[...], 0.0)

    y = conv_bn_relu(pad0, w1_ref, s1_ref, t1_ref)
    for b in range(B):        # aligned H-row stores; junk rows never written
        pad1[8 + b * S:8 + b * S + H, :] = y[b * S:b * S + H, :]
    y = conv_bn_relu(pad1, w2_ref, s2_ref, t2_ref)
    for b in range(B):
        pad2[8 + b * S:8 + b * S + H, :] = y[b * S:b * S + H, :]
    y = conv_bn_relu(pad2, w3_ref, s3_ref, t3_ref)
    for b in range(B):
        o_ref[b] = y[b * S:b * S + H, :].astype(o_ref.dtype)


def _pack_band_weights(w_hwio, W_img, dtype):
    """(3, 3, Cin, Cout) -> (3*W*Cin, W*Cout) banded matrix, dy-major along K.

    Band[dy*W*Cin + c*Cin + ci, q*Cout + co] = w[dy, c - q + 1, ci, co] if
    |c - q| <= 1 else 0, so that
        out[h, q*Cout + co] = sum_dy act_row(h + dy - 1) @ Band[dy]
    reproduces 3x3 cross-correlation with padding=1 (left/right zero-pad columns
    never enter the band; top/bottom pad rows are the zero halo rows in VMEM).
    """
    kh, kw, cin, cout = w_hwio.shape
    c = jnp.arange(W_img)[:, None]               # input image column
    q = jnp.arange(W_img)[None, :]               # output image column
    dx = c - q + 1                               # horizontal tap, valid in [0, kw)
    valid = ((dx >= 0) & (dx < kw)).astype(w_hwio.dtype)
    dx_c = jnp.clip(dx, 0, kw - 1)
    g = w_hwio[:, dx_c]                          # (kh, W, W, cin, cout)
    g = g * valid[None, :, :, None, None]
    g = jnp.transpose(g, (0, 1, 3, 2, 4))        # (kh, W, cin, W, cout)
    return g.reshape(kh * W_img * cin, W_img * cout).astype(dtype)


def _pack_channel_vec(v, W_img):
    """(Cout,) -> (1, W*Cout) matching the lane-packed (rows, W*Cout) layout."""
    return jnp.tile(v, W_img).reshape(1, W_img * v.shape[0]).astype(jnp.float32)


def double_conv_packed(x_packed, params, *, use_bf16=True, fold_k=True,
                       block_batch=None):
    """DoubleConv on lane-packed activations: (N, H, W*Cin) -> (N, H, W*Cout).

    params: 3 layers of (w (3,3,Cin,Cout), bn_scale (Cout,), bn_bias (Cout,)),
    with BatchNorm already folded into scale/bias (inference mode).
    """
    assert len(params) == 3, "DoubleConv has exactly three conv blocks"
    C_in = params[0][0].shape[2]
    C = params[0][0].shape[-1]
    assert params[1][0].shape[2] == C and params[2][0].shape[2] == C
    N, H, WC_in = x_packed.shape
    W = WC_in // C_in
    assert W * C_in == WC_in
    # Layout requirements: sublane-aligned interiors, unmasked 128-lane stores.
    assert H % 8 == 0, "H must be a multiple of 8"
    assert (W * C) % 128 == 0, "W*Cout must be a multiple of 128 (lane-dense)"

    compute_dtype = jnp.bfloat16 if use_bf16 else jnp.float32

    # Per-image row stride in the halo scratch (interior + 8 aligned halo rows),
    # and the batch-stacking factor: target M = B*S ~ 256 rows (v6e/v7x MXU),
    # keeping B a divisor of N so every grid step is full.
    # TODO(synk): for large N, cap B so the 'parallel' grid keeps >=2 steps and
    # both v7x TensorCores stay busy.
    S = H + 8
    if block_batch is None:
        block_batch = max(1, min(N, 256 // S))
    while N % block_batch:
        block_batch -= 1
    B = block_batch
    M = B * S

    packed = []
    for (w, scale, bias) in params:
        packed += [_pack_band_weights(w, W, compute_dtype),
                   _pack_channel_vec(scale, W),
                   _pack_channel_vec(bias, W)]

    kernel = functools.partial(_double_conv_kernel, B=B, H=H, S=S, fold_k=fold_k)

    # Weights / BN vectors use a constant index_map so they stay VMEM-resident
    # across grid steps.  TODO(synk): at real (im2col) weight sizes, request
    # single-buffering for them (pipeline_mode=pl.Buffered(1)).
    in_specs = [pl.BlockSpec((B, H, W * C_in), lambda n: (n, 0, 0))]
    for arr in packed:
        in_specs.append(pl.BlockSpec(arr.shape, lambda n: (0, 0)))

    return pl.pallas_call(
        kernel,
        out_shape=jax.ShapeDtypeStruct((N, H, W * C), jnp.float32),
        grid_spec=pltpu.PrefetchScalarGridSpec(
            num_scalar_prefetch=0,
            grid=(N // B,),                  # batch axis; 'parallel' for v7x TCs
            in_specs=in_specs,
            out_specs=pl.BlockSpec((B, H, W * C), lambda n: (n, 0, 0)),
            scratch_shapes=[
                pltpu.VMEM((M + 16, W * C_in), jnp.float32),  # layer-1 input
                pltpu.VMEM((M + 16, W * C), jnp.float32),     # layer-1 output
                pltpu.VMEM((M + 16, W * C), jnp.float32),     # layer-2 output
            ]),
        compiler_params=pltpu.CompilerParams(
            dimension_semantics=("parallel",),
            # Tiny here; kept explicit so spatially-tiled real shapes budget
            # against v7x's 64 MiB VMEM rather than the scoped default.
            vmem_limit_bytes=32 * 1024 * 1024),
    )(x_packed, *packed)


def double_conv(x_nchw, params, **kwargs):
    """PyTorch-interface wrapper: NCHW in / NCHW out.

    The two transposes below are full HBM passes that exist only to match the
    PyTorch layout; a real model should chain `double_conv_packed` and keep
    activations in the lane-packed (N, H, W*C) layout across blocks.
    """
    N, C_in, H, W = x_nchw.shape
    C = params[0][0].shape[-1]
    x = jnp.transpose(x_nchw, (0, 2, 3, 1)).reshape(N, H, W * C_in)
    out = double_conv_packed(x, params, **kwargs)
    return jnp.transpose(out.reshape(N, H, W, C), (0, 3, 1, 2))


def make_layer_params(key, cin, cout, eps=1e-5):
    """Deterministic synthetic Conv + BatchNorm parameters, BN folded."""
    k_w, k_g, k_b, k_m, k_v = jax.random.split(key, 5)
    fan_in = cin * 3 * 3
    bound = 1.0 / np.sqrt(fan_in)
    w_oihw = jax.random.uniform(k_w, (cout, cin, 3, 3),
                                minval=-bound, maxval=bound, dtype=jnp.float32)
    w = jnp.transpose(w_oihw, (2, 3, 1, 0))                 # (3,3,Cin,Cout)
    gamma = jax.random.uniform(k_g, (cout,), minval=0.5, maxval=1.5,
                               dtype=jnp.float32)
    beta = jax.random.normal(k_b, (cout,), dtype=jnp.float32) * 0.1
    running_mean = jax.random.normal(k_m, (cout,), dtype=jnp.float32) * 0.1
    running_var = jax.random.uniform(k_v, (cout,), minval=0.5, maxval=1.5,
                                     dtype=jnp.float32)
    scale = gamma / jnp.sqrt(running_var + eps)
    bias = beta - running_mean * scale
    return w, scale, bias


def double_conv_ref(x_nchw, params):
    """Pure-JAX reference (lax conv) for correctness checking."""
    x = x_nchw
    for (w, scale, bias) in params:
        w_oihw = jnp.transpose(w, (3, 2, 0, 1))             # -> (Cout,Cin,3,3)
        y = lax.conv_general_dilated(
            x, w_oihw, window_strides=(1, 1), padding=((1, 1), (1, 1)),
            dimension_numbers=("NCHW", "OIHW", "NCHW"))
        y = y * scale[None, :, None, None] + bias[None, :, None, None]
        x = jnp.maximum(y, 0.0)
    return x


if __name__ == "__main__":
    key = jax.random.PRNGKey(0)
    k_x, k1, k2, k3 = jax.random.split(key, 4)

    N, Cin, Cout, H, W = 2, 4, 8, 16, 16
    x = jax.random.normal(k_x, (N, Cin, H, W), dtype=jnp.float32)

    params = [
        make_layer_params(k1, Cin, Cout),
        make_layer_params(k2, Cout, Cout),
        make_layer_params(k3, Cout, Cout),
    ]

    ref = double_conv_ref(x, params)

    # Exact path: f32 operands, matches PyTorch conv numerics tightly.
    out_f32 = jax.block_until_ready(double_conv(x, params, use_bf16=False))
    np.testing.assert_allclose(np.asarray(out_f32), np.asarray(ref),
                               rtol=1e-4, atol=1e-4)

    # Fast path (default): bf16 operands / f32 accumulation, MXU-native on
    # v6e/v7x -> looser tolerance by design.
    out_bf16 = jax.block_until_ready(double_conv(x, params, use_bf16=True))
    np.testing.assert_allclose(np.asarray(out_bf16), np.asarray(ref),
                               rtol=5e-2, atol=5e-2)

    print("KERNEL_OK")
</pallas_src>

<mosaic_0001>
module attributes {stable_mosaic.version = 11 : i64} {
  func.func @_double_conv_kernel(%arg0: i32, %arg1: memref<2x16x64xf32, #tpu.memory_space<vmem>>, %arg2: memref<192x128xf32, #tpu.memory_space<vmem>>, %arg3: memref<1x128xf32, #tpu.memory_space<vmem>>, %arg4: memref<1x128xf32, #tpu.memory_space<vmem>>, %arg5: memref<384x128xf32, #tpu.memory_space<vmem>>, %arg6: memref<1x128xf32, #tpu.memory_space<vmem>>, %arg7: memref<1x128xf32, #tpu.memory_space<vmem>>, %arg8: memref<384x128xf32, #tpu.memory_space<vmem>>, %arg9: memref<1x128xf32, #tpu.memory_space<vmem>>, %arg10: memref<1x128xf32, #tpu.memory_space<vmem>>, %arg11: memref<2x16x128xf32, #tpu.memory_space<vmem>>, %arg12: memref<64x64xf32, #tpu.memory_space<vmem>>, %arg13: memref<64x128xf32, #tpu.memory_space<vmem>>, %arg14: memref<64x128xf32, #tpu.memory_space<vmem>>) attributes {dimension_semantics = [#tpu.dimension_semantics<parallel>], iteration_bounds = array<i64: 1>, scalar_prefetch = 0 : i64, scratch_operands = 3 : i64, tpu.core_type = #tpu.core_type<tc>, window_params = [{transform_indices = @transform_0, window_bounds = array<i64: 2, 16, 64>}, {pipeline_mode = #tpu.pipeline_mode<synchronous>, transform_indices = @transform_1, window_bounds = array<i64: 192, 128>}, {pipeline_mode = #tpu.pipeline_mode<synchronous>, transform_indices = @transform_2, window_bounds = array<i64: 1, 128>}, {pipeline_mode = #tpu.pipeline_mode<synchronous>, transform_indices = @transform_3, window_bounds = array<i64: 1, 128>}, {pipeline_mode = #tpu.pipeline_mode<synchronous>, transform_indices = @transform_4, window_bounds = array<i64: 384, 128>}, {pipeline_mode = #tpu.pipeline_mode<synchronous>, transform_indices = @transform_5, window_bounds = array<i64: 1, 128>}, {pipeline_mode = #tpu.pipeline_mode<synchronous>, transform_indices = @transform_6, window_bounds = array<i64: 1, 128>}, {pipeline_mode = #tpu.pipeline_mode<synchronous>, transform_indices = @transform_7, window_bounds = array<i64: 384, 128>}, {pipeline_mode = #tpu.pipeline_mode<synchronous>, transform_indices = @transform_8, window_bounds = array<i64: 1, 128>}, {pipeline_mode = #tpu.pipeline_mode<synchronous>, transform_indices = @transform_9, window_bounds = array<i64: 1, 128>}, {transform_indices = @transform_10, window_bounds = array<i64: 2, 16, 128>}]} {
    %cst = arith.constant 0.000000e+00 : f32
    %0 = vector.broadcast %cst : f32 to vector<8x64xf32>
    %c0 = arith.constant 0 : index
    %c0_0 = arith.constant 0 : index
    %1 = vector.load %arg12[%c0, %c0_0] : memref<64x64xf32, #tpu.memory_space<vmem>>, vector<8x64xf32>
    tpu.vector_store %arg12[%c0, %c0_0], %0 {strides = array<i32>} : memref<64x64xf32, #tpu.memory_space<vmem>>, vector<8x64xf32>,
    %c24 = arith.constant 24 : index
    %c0_1 = arith.constant 0 : index
    %2 = vector.load %arg12[%c24, %c0_1] : memref<64x64xf32, #tpu.memory_space<vmem>>, vector<8x64xf32>
    tpu.vector_store %arg12[%c24, %c0_1], %0 {strides = array<i32>} : memref<64x64xf32, #tpu.memory_space<vmem>>, vector<8x64xf32>,
    %c48 = arith.constant 48 : index
    %c0_2 = arith.constant 0 : index
    %3 = vector.load %arg12[%c48, %c0_2] : memref<64x64xf32, #tpu.memory_space<vmem>>, vector<8x64xf32>
    tpu.vector_store %arg12[%c48, %c0_2], %0 {strides = array<i32>} : memref<64x64xf32, #tpu.memory_space<vmem>>, vector<8x64xf32>,
    %cst_3 = arith.constant 0.000000e+00 : f32
    %4 = vector.broadcast %cst_3 : f32 to vector<8x128xf32>
    %c0_4 = arith.constant 0 : index
    %c0_5 = arith.constant 0 : index
    %5 = vector.load %arg13[%c0_4, %c0_5] : memref<64x128xf32, #tpu.memory_space<vmem>>, vector<8x128xf32>
    tpu.vector_store %arg13[%c0_4, %c0_5], %4 {strides = array<i32>} : memref<64x128xf32, #tpu.memory_space<vmem>>, vector<8x128xf32>,
    %c24_6 = arith.constant 24 : index
    %c0_7 = arith.constant 0 : index
    %6 = vector.load %arg13[%c24_6, %c0_7] : memref<64x128xf32, #tpu.memory_space<vmem>>, vector<8x128xf32>
    tpu.vector_store %arg13[%c24_6, %c0_7], %4 {strides = array<i32>} : memref<64x128xf32, #tpu.memory_space<vmem>>, vector<8x128xf32>,
    %c48_8 = arith.constant 48 : index
    %c0_9 = arith.constant 0 : index
    %7 = vector.load %arg13[%c48_8, %c0_9] : memref<64x128xf32, #tpu.memory_space<vmem>>, vector<8x128xf32>
    tpu.vector_store %arg13[%c48_8, %c0_9], %4 {strides = array<i32>} : memref<64x128xf32, #tpu.memory_space<vmem>>, vector<8x128xf32>,
    %cst_10 = arith.constant 0.000000e+00 : f32
    %8 = vector.broadcast %cst_10 : f32 to vector<8x128xf32>
    %c0_11 = arith.constant 0 : index
    %c0_12 = arith.constant 0 : index
    %9 = vector.load %arg14[%c0_11, %c0_12] : memref<64x128xf32, #tpu.memory_space<vmem>>, vector<8x128xf32>
    tpu.vector_store %arg14[%c0_11, %c0_12], %8 {strides = array<i32>} : memref<64x128xf32, #tpu.memory_space<vmem>>, vector<8x128xf32>,
    %c24_13 = arith.constant 24 : index
    %c0_14 = arith.constant 0 : index
    %10 = vector.load %arg14[%c24_13, %c0_14] : memref<64x128xf32, #tpu.memory_space<vmem>>, vector<8x128xf32>
    tpu.vector_store %arg14[%c24_13, %c0_14], %8 {strides = array<i32>} : memref<64x128xf32, #tpu.memory_space<vmem>>, vector<8x128xf32>,
    %c48_15 = arith.constant 48 : index
    %c0_16 = arith.constant 0 : index
    %11 = vector.load %arg14[%c48_15, %c0_16] : memref<64x128xf32, #tpu.memory_space<vmem>>, vector<8x128xf32>
    tpu.vector_store %arg14[%c48_15, %c0_16], %8 {strides = array<i32>} : memref<64x128xf32, #tpu.memory_space<vmem>>, vector<8x128xf32>,
    %c0_17 = arith.constant 0 : index
    %c0_18 = arith.constant 0 : index
    %c0_19 = arith.constant 0 : index
    %12 = vector.load %arg1[%c0_17, %c0_18, %c0_19] : memref<2x16x64xf32, #tpu.memory_space<vmem>>, vector<1x16x64xf32>
    %13 = vector.shape_cast %12 : vector<1x16x64xf32> to vector<16x64xf32>
    %c8 = arith.constant 8 : index
    %c0_20 = arith.constant 0 : index
    %14 = vector.load %arg12[%c8, %c0_20] : memref<64x64xf32, #tpu.memory_space<vmem>>, vector<16x64xf32>
    tpu.vector_store %arg12[%c8, %c0_20], %13 {strides = array<i32>} : memref<64x64xf32, #tpu.memory_space<vmem>>, vector<16x64xf32>,
    %c1 = arith.constant 1 : index
    %c0_21 = arith.constant 0 : index
    %c0_22 = arith.constant 0 : index
    %15 = vector.load %arg1[%c1, %c0_21, %c0_22] : memref<2x16x64xf32, #tpu.memory_space<vmem>>, vector<1x16x64xf32>
    %16 = vector.shape_cast %15 : vector<1x16x64xf32> to vector<16x64xf32>
    %c32 = arith.constant 32 : index
    %c0_23 = arith.constant 0 : index
    %17 = vector.load %arg12[%c32, %c0_23] : memref<64x64xf32, #tpu.memory_space<vmem>>, vector<16x64xf32>
    tpu.vector_store %arg12[%c32, %c0_23], %16 {strides = array<i32>} : memref<64x64xf32, #tpu.memory_space<vmem>>, vector<16x64xf32>,
    %cst_24 = arith.constant 0.000000e+00 : f32
    %18 = vector.broadcast %cst_24 : f32 to vector<48x128xf32>
    %c7 = arith.constant 7 : index
    %c0_25 = arith.constant 0 : index
    %19 = vector.load %arg12[%c7, %c0_25] : memref<64x64xf32, #tpu.memory_space<vmem>>, vector<48x64xf32>
    %c0_26 = arith.constant 0 : index
    %c0_27 = arith.constant 0 : index
    %20 = vector.load %arg2[%c0_26, %c0_27] : memref<192x128xf32, #tpu.memory_space<vmem>>, vector<64x128xf32>
    %cst_28 = arith.constant dense<0.000000e+00> : vector<48x128xf32>
    %21 = tpu.matmul %19, %20, %cst_28 {dimension_numbers = #tpu.dot_dimension_numbers<[1], [0], [0], [1], [0, 0, 1, 1], [], []>} : vector<48x64xf32>, vector<64x128xf32>, vector<48x128xf32> -> vector<48x128xf32>
    %22 = arith.addf %18, %21 : vector<48x128xf32>
    %c8_29 = arith.constant 8 : index
    %c0_30 = arith.constant 0 : index
    %23 = vector.load %arg12[%c8_29, %c0_30] : memref<64x64xf32, #tpu.memory_space<vmem>>, vector<48x64xf32>
    %c64 = arith.constant 64 : index
    %c0_31 = arith.constant 0 : index
    %24 = vector.load %arg2[%c64, %c0_31] : memref<192x128xf32, #tpu.memory_space<vmem>>, vector<64x128xf32>
    %cst_32 = arith.constant dense<0.000000e+00> : vector<48x128xf32>
    %25 = tpu.matmul %23, %24, %cst_32 {dimension_numbers = #tpu.dot_dimension_numbers<[1], [0], [0], [1], [0, 0, 1, 1], [], []>} : vector<48x64xf32>, vector<64x128xf32>, vector<48x128xf32> -> vector<48x128xf32>
    %26 = arith.addf %22, %25 : vector<48x128xf32>
    %c9 = arith.constant 9 : index
    %c0_33 = arith.constant 0 : index
    %27 = vector.load %arg12[%c9, %c0_33] : memref<64x64xf32, #tpu.memory_space<vmem>>, vector<48x64xf32>
    %c128 = arith.constant 128 : index
    %c0_34 = arith.constant 0 : index
    %28 = vector.load %arg2[%c128, %c0_34] : memref<192x128xf32, #tpu.memory_space<vmem>>, vector<64x128xf32>
    %cst_35 = arith.constant dense<0.000000e+00> : vector<48x128xf32>
    %29 = tpu.matmul %27, %28, %cst_35 {dimension_numbers = #tpu.dot_dimension_numbers<[1], [0], [0], [1], [0, 0, 1, 1], [], []>} : vector<48x64xf32>, vector<64x128xf32>, vector<48x128xf32> -> vector<48x128xf32>
    %30 = arith.addf %26, %29 : vector<48x128xf32>
    %c0_36 = arith.constant 0 : index
    %c0_37 = arith.constant 0 : index
    %31 = vector.load %arg3[%c0_36, %c0_37] : memref<1x128xf32, #tpu.memory_space<vmem>>, vector<1x128xf32>
    %32 = vector.broadcast %31 : vector<1x128xf32> to vector<48x128xf32>
    %33 = arith.mulf %30, %32 : vector<48x128xf32>
    %c0_38 = arith.constant 0 : index
    %c0_39 = arith.constant 0 : index
    %34 = vector.load %arg4[%c0_38, %c0_39] : memref<1x128xf32, #tpu.memory_space<vmem>>, vector<1x128xf32>
    %35 = vector.broadcast %34 : vector<1x128xf32> to vector<48x128xf32>
    %36 = arith.addf %33, %35 : vector<48x128xf32>
    %cst_40 = arith.constant 0.000000e+00 : f32
    %37 = vector.broadcast %cst_40 : f32 to vector<48x128xf32>
    %38 = arith.maximumf %36, %37 : vector<48x128xf32>
    %39 = vector.extract_strided_slice %38 {offsets = [0, 0], sizes = [16, 128], strides = [1, 1]} : vector<48x128xf32> to vector<16x128xf32>
    %c8_41 = arith.constant 8 : index
    %c0_42 = arith.constant 0 : index
    %40 = vector.load %arg13[%c8_41, %c0_42] : memref<64x128xf32, #tpu.memory_space<vmem>>, vector<16x128xf32>
    tpu.vector_store %arg13[%c8_41, %c0_42], %39 {strides = array<i32>} : memref<64x128xf32, #tpu.memory_space<vmem>>, vector<16x128xf32>,
    %41 = vector.extract_strided_slice %38 {offsets = [24, 0], sizes = [16, 128], strides = [1, 1]} : vector<48x128xf32> to vector<16x128xf32>
    %c32_43 = arith.constant 32 : index
    %c0_44 = arith.constant 0 : index
    %42 = vector.load %arg13[%c32_43, %c0_44] : memref<64x128xf32, #tpu.memory_space<vmem>>, vector<16x128xf32>
    tpu.vector_store %arg13[%c32_43, %c0_44], %41 {strides = array<i32>} : memref<64x128xf32, #tpu.memory_space<vmem>>, vector<16x128xf32>,
    %c7_45 = arith.constant 7 : index
    %c0_46 = arith.constant 0 : index
    %43 = vector.load %arg13[%c7_45, %c0_46] : memref<64x128xf32, #tpu.memory_space<vmem>>, vector<48x128xf32>
    %c8_47 = arith.constant 8 : index
    %c0_48 = arith.constant 0 : index
    %44 = vector.load %arg13[%c8_47, %c0_48] : memref<64x128xf32, #tpu.memory_space<vmem>>, vector<48x128xf32>
    %c9_49 = arith.constant 9 : index
    %c0_50 = arith.constant 0 : index
    %45 = vector.load %arg13[%c9_49, %c0_50] : memref<64x128xf32, #tpu.memory_space<vmem>>, vector<48x128xf32>
    %46 = tpu.concatenate %43, %44, %45 in 1 : vector<48x128xf32>, vector<48x128xf32>, vector<48x128xf32> -> vector<48x384xf32>
    %c0_51 = arith.constant 0 : index
    %c0_52 = arith.constant 0 : index
    %47 = vector.load %arg5[%c0_51, %c0_52] : memref<384x128xf32, #tpu.memory_space<vmem>>, vector<384x128xf32>
    %cst_53 = arith.constant dense<0.000000e+00> : vector<48x128xf32>
    %48 = tpu.matmul %46, %47, %cst_53 {dimension_numbers = #tpu.dot_dimension_numbers<[1], [0], [0], [1], [0, 0, 1, 1], [], []>} : vector<48x384xf32>, vector<384x128xf32>, vector<48x128xf32> -> vector<48x128xf32>
    %c0_54 = arith.constant 0 : index
    %c0_55 = arith.constant 0 : index
    %49 = vector.load %arg6[%c0_54, %c0_55] : memref<1x128xf32, #tpu.memory_space<vmem>>, vector<1x128xf32>
    %50 = vector.broadcast %49 : vector<1x128xf32> to vector<48x128xf32>
    %51 = arith.mulf %48, %50 : vector<48x128xf32>
    %c0_56 = arith.constant 0 : index
    %c0_57 = arith.constant 0 : index
    %52 = vector.load %arg7[%c0_56, %c0_57] : memref<1x128xf32, #tpu.memory_space<vmem>>, vector<1x128xf32>
    %53 = vector.broadcast %52 : vector<1x128xf32> to vector<48x128xf32>
    %54 = arith.addf %51, %53 : vector<48x128xf32>
    %cst_58 = arith.constant 0.000000e+00 : f32
    %55 = vector.broadcast %cst_58 : f32 to vector<48x128xf32>
    %56 = arith.maximumf %54, %55 : vector<48x128xf32>
    %57 = vector.extract_strided_slice %56 {offsets = [0, 0], sizes = [16, 128], strides = [1, 1]} : vector<48x128xf32> to vector<16x128xf32>
    %c8_59 = arith.constant 8 : index
    %c0_60 = arith.constant 0 : index
    %58 = vector.load %arg14[%c8_59, %c0_60] : memref<64x128xf32, #tpu.memory_space<vmem>>, vector<16x128xf32>
    tpu.vector_store %arg14[%c8_59, %c0_60], %57 {strides = array<i32>} : memref<64x128xf32, #tpu.memory_space<vmem>>, vector<16x128xf32>,
    %59 = vector.extract_strided_slice %56 {offsets = [24, 0], sizes = [16, 128], strides = [1, 1]} : vector<48x128xf32> to vector<16x128xf32>
    %c32_61 = arith.constant 32 : index
    %c0_62 = arith.constant 0 : index
    %60 = vector.load %arg14[%c32_61, %c0_62] : memref<64x128xf32, #tpu.memory_space<vmem>>, vector<16x128xf32>
    tpu.vector_store %arg14[%c32_61, %c0_62], %59 {strides = array<i32>} : memref<64x128xf32, #tpu.memory_space<vmem>>, vector<16x128xf32>,
    %c7_63 = arith.constant 7 : index
    %c0_64 = arith.constant 0 : index
    %61 = vector.load %arg14[%c7_63, %c0_64] : memref<64x128xf32, #tpu.memory_space<vmem>>, vector<48x128xf32>
    %c8_65 = arith.constant 8 : index
    %c0_66 = arith.constant 0 : index
    %62 = vector.load %arg14[%c8_65, %c0_66] : memref<64x128xf32, #tpu.memory_space<vmem>>, vector<48x128xf32>
    %c9_67 = arith.constant 9 : index
    %c0_68 = arith.constant 0 : index
    %63 = vector.load %arg14[%c9_67, %c0_68] : memref<64x128xf32, #tpu.memory_space<vmem>>, vector<48x128xf32>
    %64 = tpu.concatenate %61, %62, %63 in 1 : vector<48x128xf32>, vector<48x128xf32>, vector<48x128xf32> -> vector<48x384xf32>
    %c0_69 = arith.constant 0 : index
    %c0_70 = arith.constant 0 : index
    %65 = vector.load %arg8[%c0_69, %c0_70] : memref<384x128xf32, #tpu.memory_space<vmem>>, vector<384x128xf32>
    %cst_71 = arith.constant dense<0.000000e+00> : vector<48x128xf32>
    %66 = tpu.matmul %64, %65, %cst_71 {dimension_numbers = #tpu.dot_dimension_numbers<[1], [0], [0], [1], [0, 0, 1, 1], [], []>} : vector<48x384xf32>, vector<384x128xf32>, vector<48x128xf32> -> vector<48x128xf32>
    %c0_72 = arith.constant 0 : index
    %c0_73 = arith.constant 0 : index
    %67 = vector.load %arg9[%c0_72, %c0_73] : memref<1x128xf32, #tpu.memory_space<vmem>>, vector<1x128xf32>
    %68 = vector.broadcast %67 : vector<1x128xf32> to vector<48x128xf32>
    %69 = arith.mulf %66, %68 : vector<48x128xf32>
    %c0_74 = arith.constant 0 : index
    %c0_75 = arith.constant 0 : index
    %70 = vector.load %arg10[%c0_74, %c0_75] : memref<1x128xf32, #tpu.memory_space<vmem>>, vector<1x128xf32>
    %71 = vector.broadcast %70 : vector<1x128xf32> to vector<48x128xf32>
    %72 = arith.addf %69, %71 : vector<48x128xf32>
    %cst_76 = arith.constant 0.000000e+00 : f32
    %73 = vector.broadcast %cst_76 : f32 to vector<48x128xf32>
    %74 = arith.maximumf %72, %73 : vector<48x128xf32>
    %75 = vector.extract_strided_slice %74 {offsets = [0, 0], sizes = [16, 128], strides = [1, 1]} : vector<48x128xf32> to vector<16x128xf32>
    %c0_77 = arith.constant 0 : index
    %c0_78 = arith.constant 0 : index
    %c0_79 = arith.constant 0 : index
    %76 = vector.load %arg11[%c0_77, %c0_78, %c0_79] : memref<2x16x128xf32, #tpu.memory_space<vmem>>, vector<1x16x128xf32>
    %77 = vector.shape_cast %76 : vector<1x16x128xf32> to vector<16x128xf32>
    %78 = vector.shape_cast %75 : vector<16x128xf32> to vector<1x16x128xf32>
    tpu.vector_store %arg11[%c0_77, %c0_78, %c0_79], %78 {strides = array<i32>} : memref<2x16x128xf32, #tpu.memory_space<vmem>>, vector<1x16x128xf32>,
    %79 = vector.extract_strided_slice %74 {offsets = [24, 0], sizes = [16, 128], strides = [1, 1]} : vector<48x128xf32> to vector<16x128xf32>
    %c1_80 = arith.constant 1 : index
    %c0_81 = arith.constant 0 : index
    %c0_82 = arith.constant 0 : index
    %80 = vector.load %arg11[%c1_80, %c0_81, %c0_82] : memref<2x16x128xf32, #tpu.memory_space<vmem>>, vector<1x16x128xf32>
    %81 = vector.shape_cast %80 : vector<1x16x128xf32> to vector<16x128xf32>
    %82 = vector.shape_cast %79 : vector<16x128xf32> to vector<1x16x128xf32>
    tpu.vector_store %arg11[%c1_80, %c0_81, %c0_82], %82 {strides = array<i32>} : memref<2x16x128xf32, #tpu.memory_space<vmem>>, vector<1x16x128xf32>,
    return
  }
  func.func @transform_0(%arg0: i32) -> (i32, i32, i32) {
    %c0_i32 = arith.constant 0 : i32
    %c0_i32_0 = arith.constant 0 : i32
    %c0_i32_1 = arith.constant 0 : i32
    return %arg0, %c0_i32, %c0_i32_0 : i32, i32, i32
  }
  func.func @transform_1(%arg0: i32) -> (i32, i32) {
    %c0_i32 = arith.constant 0 : i32
    %c0_i32_0 = arith.constant 0 : i32
    %c0_i32_1 = arith.constant 0 : i32
    return %c0_i32, %c0_i32_0 : i32, i32
  }
  func.func @transform_2(%arg0: i32) -> (i32, i32) {
    %c0_i32 = arith.constant 0 : i32
    %c0_i32_0 = arith.constant 0 : i32
    %c0_i32_1 = arith.constant 0 : i32
    return %c0_i32, %c0_i32_0 : i32, i32
  }
  func.func @transform_3(%arg0: i32) -> (i32, i32) {
    %c0_i32 = arith.constant 0 : i32
    %c0_i32_0 = arith.constant 0 : i32
    %c0_i32_1 = arith.constant 0 : i32
    return %c0_i32, %c0_i32_0 : i32, i32
  }
  func.func @transform_4(%arg0: i32) -> (i32, i32) {
    %c0_i32 = arith.constant 0 : i32
    %c0_i32_0 = arith.constant 0 : i32
    %c0_i32_1 = arith.constant 0 : i32
    return %c0_i32, %c0_i32_0 : i32, i32
  }
  func.func @transform_5(%arg0: i32) -> (i32, i32) {
    %c0_i32 = arith.constant 0 : i32
    %c0_i32_0 = arith.constant 0 : i32
    %c0_i32_1 = arith.constant 0 : i32
    return %c0_i32, %c0_i32_0 : i32, i32
  }
  func.func @transform_6(%arg0: i32) -> (i32, i32) {
    %c0_i32 = arith.constant 0 : i32
    %c0_i32_0 = arith.constant 0 : i32
    %c0_i32_1 = arith.constant 0 : i32
    return %c0_i32, %c0_i32_0 : i32, i32
  }
  func.func @transform_7(%arg0: i32) -> (i32, i32) {
    %c0_i32 = arith.constant 0 : i32
    %c0_i32_0 = arith.constant 0 : i32
    %c0_i32_1 = arith.constant 0 : i32
    return %c0_i32, %c0_i32_0 : i32, i32
  }
  func.func @transform_8(%arg0: i32) -> (i32, i32) {
    %c0_i32 = arith.constant 0 : i32
    %c0_i32_0 = arith.constant 0 : i32
    %c0_i32_1 = arith.constant 0 : i32
    return %c0_i32, %c0_i32_0 : i32, i32
  }
  func.func @transform_9(%arg0: i32) -> (i32, i32) {
    %c0_i32 = arith.constant 0 : i32
    %c0_i32_0 = arith.constant 0 : i32
    %c0_i32_1 = arith.constant 0 : i32
    return %c0_i32, %c0_i32_0 : i32, i32
  }
  func.func @transform_10(%arg0: i32) -> (i32, i32, i32) {
    %c0_i32 = arith.constant 0 : i32
    %c0_i32_0 = arith.constant 0 : i32
    %c0_i32_1 = arith.constant 0 : i32
    return %arg0, %c0_i32, %c0_i32_0 : i32, i32, i32
  }
}

</mosaic_0001>

<llo_original>
// kernel: tpu_custom_call.1
$region0: #{tpu_custom_call.1}
  #allocation0 [shape = 'u32[]', space=smem, size = 0x4, offset = 0x4, fixed_abs, tag = 'smem constant byte address 0x4 - core index']
  #allocation1 [shape = 'u32[144,128]{1,0:T(1,128)}', space=vmem, size = 0x12000, scoped, tag = 'internal scratch']
  #allocation2 [shape = 'f32[64,64]{1,0:T(8,128)}', space=vmem, size = 0x8000, scoped, tag = 'scratch operand']
  #allocation3 [shape = 'f32[64,128]{1,0:T(8,128)}', space=vmem, size = 0x8000, scoped, tag = 'scratch operand']
  #allocation4 [shape = 'f32[64,128]{1,0:T(8,128)}', space=vmem, size = 0x8000, scoped, tag = 'scratch operand']
  %s0 = inlined_call_operand.hbm [shape: f32[2,16,64], index: 0, kind: input, shape index: {}]
  %s1 = inlined_call_operand.hbm [shape: f32[192,128], index: 1, kind: input, shape index: {}]
  %s2 = inlined_call_operand.vmem [shape: f32[1,128], index: 2, kind: input, shape index: {}]
  %s3 = inlined_call_operand.vmem [shape: f32[1,128], index: 3, kind: input, shape index: {}]
  %s4 = inlined_call_operand.hbm [shape: f32[384,128], index: 4, kind: input, shape index: {}]
  %s5 = inlined_call_operand.vmem [shape: f32[1,128], index: 5, kind: input, shape index: {}]
  %s6 = inlined_call_operand.vmem [shape: f32[1,128], index: 6, kind: input, shape index: {}]
  %s7 = inlined_call_operand.hbm [shape: f32[384,128], index: 7, kind: input, shape index: {}]
  %s8 = inlined_call_operand.vmem [shape: f32[1,128], index: 8, kind: input, shape index: {}]
  %s9 = inlined_call_operand.vmem [shape: f32[1,128], index: 9, kind: input, shape index: {}]
  %s10 = inlined_call_operand.hbm [shape: f32[2,16,128], index: 10, kind: output, shape index: {}]
  %s11 = sld [smem:[#allocation0]]
  $region66: #{tpu_custom_call.1} parent=0
    _
  %s13 = ssub.s32 1, %s11
  %s14 = scalar_select 0, %s13, %s11
  $region1: #{tpu_custom_call.1} parent=0
    #allocation5 [shape = 'u8[16384]{0}', space=vmem, size = 0x4000, scoped, tag = 'input window, operand 0, single buffered']
    #allocation6 [shape = 's32[1]{0}', space=sflag, size = 0x4, scoped, tag = 'scoped memory for tpu_custom_call.1']
    #allocation7 [shape = 's32[1]{0}', space=sflag, size = 0x4, scoped, tag = 'scoped memory for tpu_custom_call.1']
    #allocation8 [shape = 'u8[98304]{0}', space=vmem, size = 0x18000, scoped, tag = 'input window, operand 1, single buffered']
    #allocation9 [shape = 's32[1]{0}', space=sflag, size = 0x4, scoped, tag = 'scoped memory for tpu_custom_call.1']
    #allocation10 [shape = 'u8[196608]{0}', space=vmem, size = 0x30000, scoped, tag = 'input window, operand 4, single buffered']
    #allocation11 [shape = 'u8[196608]{0}', space=vmem, size = 0x30000, scoped, tag = 'input window, operand 7, single buffered']
    #allocation12 [shape = 's32[1]{0}', space=sflag, size = 0x4, scoped, tag = 'scoped memory for tpu_custom_call.1']
    #allocation13 [shape = 'u8[16384]{0}', space=vmem, size = 0x4000, scoped, tag = 'output window, operand 0, single buffered']
    %15 = vsyncpa [#allocation6], 0
    %16 = vsyncpa [#allocation9], 0
    %17 = vsyncpa [#allocation12], 0
    %18 = vsyncpa [#allocation7], 0
    // Predicated region
    $region2: #{tpu_custom_call.1} parent=1 // pred_check
      _
    $region3: #{tpu_custom_call.1} parent=1 // pred_check_branch
      %20 = sbr.rel (0) target = $region5
    $region4: #{tpu_custom_call.1} parent=1 // pred_region
      %s22 = ssub.s32 512, 512
      %23 = vsyncadd [#allocation6], %s22
      %s24 = sshll.u32 [#allocation5], 4
      %s25 = int_to_ptr.vmem [resolvable:$true] %s24
      %30 = dma.hbm_to_vmem [thread:$0]  %s0, 512, %s25, [#allocation6], 128, 128, 8
    $region5: #{tpu_custom_call.1} parent=1 // pred_fallthru
      _
    // Predicated region
    $region6: #{tpu_custom_call.1} parent=1 // pred_check
      _
    $region7: #{tpu_custom_call.1} parent=1 // pred_check_branch
      %32 = sbr.rel (0) target = $region9
    $region8: #{tpu_custom_call.1} parent=1 // pred_region
      %s34 = ssub.s32 3072, 3072
      %35 = vsyncadd [#allocation9], %s34
      %s36 = sshll.u32 [#allocation8], 4
      %s37 = int_to_ptr.vmem [resolvable:$true] %s36
      %42 = dma.hbm_to_vmem [thread:$0]  %s1, 3072, %s37, [#allocation9], 128, 128, 8
    $region9: #{tpu_custom_call.1} parent=1 // pred_fallthru
      _
    // Predicated region
    $region10: #{tpu_custom_call.1} parent=1 // pred_check
      _
    $region11: #{tpu_custom_call.1} parent=1 // pred_check_branch
      %44 = sbr.rel (0) target = $region13
    $region12: #{tpu_custom_call.1} parent=1 // pred_region
      _
    $region13: #{tpu_custom_call.1} parent=1 // pred_fallthru
      _
    // Predicated region
    $region14: #{tpu_custom_call.1} parent=1 // pred_check
      _
    $region15: #{tpu_custom_call.1} parent=1 // pred_check_branch
      %46 = sbr.rel (0) target = $region17
    $region16: #{tpu_custom_call.1} parent=1 // pred_region
      _
    $region17: #{tpu_custom_call.1} parent=1 // pred_fallthru
      _
    // Predicated region
    $region18: #{tpu_custom_call.1} parent=1 // pred_check
      _
    $region19: #{tpu_custom_call.1} parent=1 // pred_check_branch
      %48 = sbr.rel (0) target = $region21
    $region20: #{tpu_custom_call.1} parent=1 // pred_region
      %s50 = ssub.s32 6144, 6144
      %51 = vsyncadd [#allocation9], %s50
      %s52 = sshll.u32 [#allocation10], 4
      %s53 = int_to_ptr.vmem [resolvable:$true] %s52
      %58 = dma.hbm_to_vmem [thread:$0]  %s4, 6144, %s53, [#allocation9], 128, 128, 8
    $region21: #{tpu_custom_call.1} parent=1 // pred_fallthru
      _
    // Predicated region
    $region22: #{tpu_custom_call.1} parent=1 // pred_check
      _
    $region23: #{tpu_custom_call.1} parent=1 // pred_check_branch
      %60 = sbr.rel (0) target = $region25
    $region24: #{tpu_custom_call.1} parent=1 // pred_region
      _
    $region25: #{tpu_custom_call.1} parent=1 // pred_fallthru
      _
    // Predicated region
    $region26: #{tpu_custom_call.1} parent=1 // pred_check
      _
    $region27: #{tpu_custom_call.1} parent=1 // pred_check_branch
      %62 = sbr.rel (0) target = $region29
    $region28: #{tpu_custom_call.1} parent=1 // pred_region
      _
    $region29: #{tpu_custom_call.1} parent=1 // pred_fallthru
      _
    // Predicated region
    $region30: #{tpu_custom_call.1} parent=1 // pred_check
      _
    $region31: #{tpu_custom_call.1} parent=1 // pred_check_branch
      %64 = sbr.rel (0) target = $region33
    $region32: #{tpu_custom_call.1} parent=1 // pred_region
      %s66 = ssub.s32 6144, 6144
      %67 = vsyncadd [#allocation12], %s66
      %s68 = sshll.u32 [#allocation11], 4
      %s69 = int_to_ptr.vmem [resolvable:$true] %s68
      %74 = dma.hbm_to_vmem [thread:$0]  %s7, 6144, %s69, [#allocation12], 128, 128, 8
    $region33: #{tpu_custom_call.1} parent=1 // pred_fallthru
      _
    // Predicated region
    $region34: #{tpu_custom_call.1} parent=1 // pred_check
      _
    $region35: #{tpu_custom_call.1} parent=1 // pred_check_branch
      %76 = sbr.rel (0) target = $region37
    $region36: #{tpu_custom_call.1} parent=1 // pred_region
      _
    $region37: #{tpu_custom_call.1} parent=1 // pred_fallthru
      _
    // Predicated region
    $region38: #{tpu_custom_call.1} parent=1 // pred_check
      _
    $region39: #{tpu_custom_call.1} parent=1 // pred_check_branch
      %78 = sbr.rel (0) target = $region41
    $region40: #{tpu_custom_call.1} parent=1 // pred_region
      _
    $region41: #{tpu_custom_call.1} parent=1 // pred_fallthru
      _
    // Predicated region
    $region42: #{tpu_custom_call.1} parent=1 // pred_check
      _
    $region43: #{tpu_custom_call.1} parent=1 // pred_check_branch
      %80 = sbr.rel (0) target = $region45
    $region44: #{tpu_custom_call.1} parent=1 // pred_region
      %81 = dma.done [#allocation6], 512
    $region45: #{tpu_custom_call.1} parent=1 // pred_fallthru
      _
    // Predicated region
    $region46: #{tpu_custom_call.1} parent=1 // pred_check
      _
    $region47: #{tpu_custom_call.1} parent=1 // pred_check_branch
      %83 = sbr.rel (0) target = $region49
    $region48: #{tpu_custom_call.1} parent=1 // pred_region
      %84 = dma.done [#allocation9], 3072
    $region49: #{tpu_custom_call.1} parent=1 // pred_fallthru
      _
    // Predicated region
    $region50: #{tpu_custom_call.1} parent=1 // pred_check
      _
    $region51: #{tpu_custom_call.1} parent=1 // pred_check_branch
      %86 = sbr.rel (0) target = $region53
    $region52: #{tpu_custom_call.1} parent=1 // pred_region
      %87 = dma.done [#allocation9], 6144
    $region53: #{tpu_custom_call.1} parent=1 // pred_fallthru
      _
    // Predicated region
    $region54: #{tpu_custom_call.1} parent=1 // pred_check
      _
    $region55: #{tpu_custom_call.1} parent=1 // pred_check_branch
      %89 = sbr.rel (0) target = $region57
    $region56: #{tpu_custom_call.1} parent=1 // pred_region
      %90 = dma.done [#allocation12], 6144
    $region57: #{tpu_custom_call.1} parent=1 // pred_fallthru
      _
    %vm91 = vcmask 523264
    %92 = vst.msk [vmem:[#allocation2] sm:$0xff] %vm91, 0.0
    %93 = vst.msk [vmem:[#allocation2 + $0x18] sm:$0xff] %vm91, 0.0
    %94 = vst.msk [vmem:[#allocation2 + $0x30] sm:$0xff] %vm91, 0.0
    %95 = vst [vmem:[#allocation3] sm:$0xff] 0.0
    %96 = vst [vmem:[#allocation3 + $0x18] sm:$0xff] 0.0
    %97 = vst [vmem:[#allocation3 + $0x30] sm:$0xff] 0.0
    %98 = vst [vmem:[#allocation4] sm:$0xff] 0.0
    %99 = vst [vmem:[#allocation4 + $0x18] sm:$0xff] 0.0
    %100 = vst [vmem:[#allocation4 + $0x30] sm:$0xff] 0.0
    %v101 = vld [vmem:[#allocation5] sm:$0xff]
    %v102 = vld [vmem:[#allocation5 + $0x8] sm:$0xff]
    %103 = vst.msk [vmem:[#allocation2 + $0x8] sm:$0xff] %vm91, %v101
    %104 = vst.msk [vmem:[#allocation2 + $0x10] sm:$0xff] %vm91, %v102
    %s105 = scalar_lea.vmem [#allocation5], 16
    %v106 = vld [vmem:[%s105] sm:$0xff]
    %v107 = vld [vmem:[%s105 + $0x8] sm:$0xff]
    %108 = vst.msk [vmem:[#allocation2 + $0x20] sm:$0xff] %vm91, %v106
    %109 = vst.msk [vmem:[#allocation2 + $0x28] sm:$0xff] %vm91, %v107
    %v110 = vld [vmem:[#allocation2 + $0x7] sm:$0xff]
    %v111 = vld [vmem:[#allocation2 + $0xf] sm:$0xff]
    %v112 = vld [vmem:[#allocation2 + $0x17] sm:$0xff]
    %v113 = vld [vmem:[#allocation2 + $0x1f] sm:$0xff]
    %v114 = vld [vmem:[#allocation2 + $0x27] sm:$0xff]
    %v115 = vld [vmem:[#allocation2 + $0x2f] sm:$0xff]
    %v116 = vld [vmem:[#allocation8] sm:$0xff]
    %v117 = vld [vmem:[#allocation8 + $0x8] sm:$0xff]
    %v118 = vld [vmem:[#allocation8 + $0x10] sm:$0xff]
    %v119 = vld [vmem:[#allocation8 + $0x18] sm:$0xff]
    %v120 = vld [vmem:[#allocation8 + $0x20] sm:$0xff]
    %v121 = vld [vmem:[#allocation8 + $0x28] sm:$0xff]
    %v122 = vld [vmem:[#allocation8 + $0x30] sm:$0xff]
    %v123 = vld [vmem:[#allocation8 + $0x38] sm:$0xff]
    %v124 = vld [vmem:[#allocation2 + $0x8] sm:$0xff]
    %v125 = vld [vmem:[#allocation2 + $0x10] sm:$0xff]
    %v126 = vld [vmem:[#allocation2 + $0x18] sm:$0xff]
    %v127 = vld [vmem:[#allocation2 + $0x20] sm:$0xff]
    %v128 = vld [vmem:[#allocation2 + $0x28] sm:$0xff]
    %v129 = vld [vmem:[#allocation2 + $0x30] sm:$0xff]
    %v130 = vld [vmem:[#allocation8 + $0x40] sm:$0xff]
    %v131 = vld [vmem:[#allocation8 + $0x48] sm:$0xff]
    %v132 = vld [vmem:[#allocation8 + $0x50] sm:$0xff]
    %v133 = vld [vmem:[#allocation8 + $0x58] sm:$0xff]
    %v134 = vld [vmem:[#allocation8 + $0x60] sm:$0xff]
    %v135 = vld [vmem:[#allocation8 + $0x68] sm:$0xff]
    %v136 = vld [vmem:[#allocation8 + $0x70] sm:$0xff]
    %v137 = vld [vmem:[#allocation8 + $0x78] sm:$0xff]
    %v139 = vsel %vm91, %v124, 0
    %v142 = vsel %vm91, %v125, 0
    %v145 = vsel %vm91, %v126, 0
    %v148 = vsel %vm91, %v127, 0
    %v151 = vsel %vm91, %v128, 0
    %v154 = vsel %vm91, %v129, 0
    %156 = vmatprep.subr.mxu0 0.0
    %157 = vmatpush1.msra.mxu0 0.0
    %158 = vmatprep.subr.mxu0 0.0
    %159 = vmatpush1.msra.mxu0 0.0
    %160 = vmatprep.subr.mxu0 0.0
    %161 = vmatpush1.msra.mxu0 0.0
    %162 = vmatprep.subr.mxu0 0.0
    %163 = vmatpush1.msra.mxu0 0.0
    %164 = vmatprep.subr.mxu0 0.0
    %165 = vmatpush1.msra.mxu0 0.0
    %166 = vmatprep.subr.mxu0 0.0
    %167 = vmatpush1.msra.mxu0 0.0
    %168 = vmatprep.subr.mxu0 0.0
    %169 = vmatpush1.msra.mxu0 0.0
    %170 = vmatprep.subr.mxu0 0.0
    %171 = vmatpush1.msra.mxu0 0.0
    %172 = vmatprep.subr.mxu0 0.0
    %173 = vmatpush1.msra.mxu0 %v137
    %174 = vmatprep.subr.mxu0 0.0
    %175 = vmatpush1.msra.mxu0 %v136
    %176 = vmatprep.subr.mxu0 0.0
    %177 = vmatpush1.msra.mxu0 %v135
    %178 = vmatprep.subr.mxu0 0.0
    %179 = vmatpush1.msra.mxu0 %v134
    %180 = vmatprep.subr.mxu0 0.0
    %181 = vmatpush1.msra.mxu0 %v133
    %182 = vmatprep.subr.mxu0 0.0
    %183 = vmatpush1.msra.mxu0 %v132
    %184 = vmatprep.subr.mxu0 0.0
    %185 = vmatpush1.msra.mxu0 %v131
    %186 = vmatprep.subr.mxu0 0.0
    %187 = vmatpush1.msra.mxu0 %v130
    %188 = vmatprep.subr.mxu0 0.0
    %189 = vmatpush2.msra.mxu0 0.0
    %190 = vmatprep.subr.mxu0 0.0
    %191 = vmatpush2.msra.mxu0 0.0
    %192 = vmatprep.subr.mxu0 0.0
    %193 = vmatpush2.msra.mxu0 0.0
    %194 = vmatprep.subr.mxu0 0.0
    %195 = vmatpush2.msra.mxu0 0.0
    %196 = vmatprep.subr.mxu0 0.0
    %197 = vmatpush2.msra.mxu0 0.0
    %198 = vmatprep.subr.mxu0 0.0
    %199 = vmatpush2.msra.mxu0 0.0
    %200 = vmatprep.subr.mxu0 0.0
    %201 = vmatpush2.msra.mxu0 0.0
    %202 = vmatprep.subr.mxu0 0.0
    %203 = vmatpush2.msra.mxu0 0.0
    %204 = vmatprep.subr.mxu0 0.0
    %205 = vmatpush2.msra.mxu0 0.0
    %206 = vmatprep.subr.mxu0 0.0
    %207 = vmatpush2.msra.mxu0 0.0
    %208 = vmatprep.subr.mxu0 0.0
    %209 = vmatpush2.msra.mxu0 0.0
    %210 = vmatprep.subr.mxu0 0.0
    %211 = vmatpush2.msra.mxu0 0.0
    %212 = vmatprep.subr.mxu0 0.0
    %213 = vmatpush2.msra.mxu0 0.0
    %214 = vmatprep.subr.mxu0 0.0
    %215 = vmatpush2.msra.mxu0 0.0
    %216 = vmatprep.subr.mxu0 0.0
    %217 = vmatpush2.msra.mxu0 0.0
    %218 = vmatprep.subr.mxu0 0.0
    %219 = vmatpush2.msra.mxu0 0.0
    %220 = vmatprep.mubr.f32.mxu0 0.0
    %221 = vmatmul.mubr.f32.gmra.mxu0 %v139
    %v222 = vpop.f32.mrf.mxu0
    %v223 = vadd.f32 0.0, %v222
    %v224 = vpop.f32.mrf.mxu0
    %225 = vmatprep.mubr.f32.mxu0 0.0
    %226 = vmatmul.mubr.f32.gmra.mxu0 %v142
    %v227 = vpop.f32.mrf.mxu0
    %v228 = vadd.f32 0.0, %v227
    %v229 = vpop.f32.mrf.mxu0
    %230 = vmatprep.mubr.f32.mxu0 0.0
    %231 = vmatmul.mubr.f32.gmra.mxu0 %v145
    %v232 = vpop.f32.mrf.mxu0
    %v233 = vpop.f32.mrf.mxu0
    %234 = vmatprep.mubr.f32.mxu0 0.0
    %235 = vmatmul.mubr.f32.gmra.mxu0 %v148
    %v236 = vpop.f32.mrf.mxu0
    %v237 = vadd.f32 0.0, %v236
    %v238 = vpop.f32.mrf.mxu0
    %239 = vmatprep.mubr.f32.mxu0 0.0
    %240 = vmatmul.mubr.f32.gmra.mxu0 %v151
    %v241 = vpop.f32.mrf.mxu0
    %v242 = vadd.f32 0.0, %v241
    %v243 = vpop.f32.mrf.mxu0
    %244 = vmatprep.mubr.f32.mxu0 0.0
    %245 = vmatmul.mubr.f32.gmra.mxu0 %v154
    %v246 = vpop.f32.mrf.mxu0
    %v247 = vpop.f32.mrf.mxu0
    %248 = vdwg.mxu0
    %v250 = vsel %vm91, %v110, 0
    %v253 = vsel %vm91, %v111, 0
    %v256 = vsel %vm91, %v112, 0
    %v259 = vsel %vm91, %v113, 0
    %v262 = vsel %vm91, %v114, 0
    %v265 = vsel %vm91, %v115, 0
    %267 = vmatprep.subr.mxu0 0.0
    %268 = vmatpush1.msra.mxu0 0.0
    %269 = vmatprep.subr.mxu0 0.0
    %270 = vmatpush1.msra.mxu0 0.0
    %271 = vmatprep.subr.mxu0 0.0
    %272 = vmatpush1.msra.mxu0 0.0
    %273 = vmatprep.subr.mxu0 0.0
    %274 = vmatpush1.msra.mxu0 0.0
    %275 = vmatprep.subr.mxu0 0.0
    %276 = vmatpush1.msra.mxu0 0.0
    %277 = vmatprep.subr.mxu0 0.0
    %278 = vmatpush1.msra.mxu0 0.0
    %279 = vmatprep.subr.mxu0 0.0
    %280 = vmatpush1.msra.mxu0 0.0
    %281 = vmatprep.subr.mxu0 0.0
    %282 = vmatpush1.msra.mxu0 0.0
    %283 = vmatprep.subr.mxu0 0.0
    %284 = vmatpush1.msra.mxu0 %v123
    %285 = vmatprep.subr.mxu0 0.0
    %286 = vmatpush1.msra.mxu0 %v122
    %287 = vmatprep.subr.mxu0 0.0
    %288 = vmatpush1.msra.mxu0 %v121
    %289 = vmatprep.subr.mxu0 0.0
    %290 = vmatpush1.msra.mxu0 %v120
    %291 = vmatprep.subr.mxu0 0.0
    %292 = vmatpush1.msra.mxu0 %v119
    %293 = vmatprep.subr.mxu0 0.0
    %294 = vmatpush1.msra.mxu0 %v118
    %295 = vmatprep.subr.mxu0 0.0
    %296 = vmatpush1.msra.mxu0 %v117
    %297 = vmatprep.subr.mxu0 0.0
    %298 = vmatpush1.msra.mxu0 %v116
    %299 = vmatprep.subr.mxu0 0.0
    %300 = vmatpush2.msra.mxu0 0.0
    %301 = vmatprep.subr.mxu0 0.0
    %302 = vmatpush2.msra.mxu0 0.0
    %303 = vmatprep.subr.mxu0 0.0
    %304 = vmatpush2.msra.mxu0 0.0
    %305 = vmatprep.subr.mxu0 0.0
    %306 = vmatpush2.msra.mxu0 0.0
    %307 = vmatprep.subr.mxu0 0.0
    %308 = vmatpush2.msra.mxu0 0.0
    %309 = vmatprep.subr.mxu0 0.0
    %310 = vmatpush2.msra.mxu0 0.0
    %311 = vmatprep.subr.mxu0 0.0
    %312 = vmatpush2.msra.mxu0 0.0
    %313 = vmatprep.subr.mxu0 0.0
    %314 = vmatpush2.msra.mxu0 0.0
    %315 = vmatprep.subr.mxu0 0.0
    %316 = vmatpush2.msra.mxu0 0.0
    %317 = vmatprep.subr.mxu0 0.0
    %318 = vmatpush2.msra.mxu0 0.0
    %319 = vmatprep.subr.mxu0 0.0
    %320 = vmatpush2.msra.mxu0 0.0
    %321 = vmatprep.subr.mxu0 0.0
    %322 = vmatpush2.msra.mxu0 0.0
    %323 = vmatprep.subr.mxu0 0.0
    %324 = vmatpush2.msra.mxu0 0.0
    %325 = vmatprep.subr.mxu0 0.0
    %326 = vmatpush2.msra.mxu0 0.0
    %327 = vmatprep.subr.mxu0 0.0
    %328 = vmatpush2.msra.mxu0 0.0
    %329 = vmatprep.subr.mxu0 0.0
    %330 = vmatpush2.msra.mxu0 0.0
    %331 = vmatprep.mubr.f32.mxu0 0.0
    %332 = vmatmul.mubr.f32.gmra.mxu0 %v250
    %v333 = vpop.f32.mrf.mxu0
    %v334 = vadd.f32 %v223, %v333
    %v335 = vpop.f32.mrf.mxu0
    %336 = vmatprep.mubr.f32.mxu0 0.0
    %337 = vmatmul.mubr.f32.gmra.mxu0 %v253
    %v338 = vpop.f32.mrf.mxu0
    %v339 = vadd.f32 %v228, %v338
    %v340 = vpop.f32.mrf.mxu0
    %341 = vmatprep.mubr.f32.mxu0 0.0
    %342 = vmatmul.mubr.f32.gmra.mxu0 %v256
    %v343 = vpop.f32.mrf.mxu0
    %v344 = vpop.f32.mrf.mxu0
    %345 = vmatprep.mubr.f32.mxu0 0.0
    %346 = vmatmul.mubr.f32.gmra.mxu0 %v259
    %v347 = vpop.f32.mrf.mxu0
    %v348 = vadd.f32 %v237, %v347
    %v349 = vpop.f32.mrf.mxu0
    %350 = vmatprep.mubr.f32.mxu0 0.0
    %351 = vmatmul.mubr.f32.gmra.mxu0 %v262
    %v352 = vpop.f32.mrf.mxu0
    %v353 = vadd.f32 %v242, %v352
    %v354 = vpop.f32.mrf.mxu0
    %355 = vmatprep.mubr.f32.mxu0 0.0
    %356 = vmatmul.mubr.f32.gmra.mxu0 %v265
    %v357 = vpop.f32.mrf.mxu0
    %v358 = vpop.f32.mrf.mxu0
    %359 = vdwg.mxu0
    %v360 = vld [vmem:[#allocation2 + $0x9] sm:$0xff]
    %v361 = vld [vmem:[#allocation2 + $0x11] sm:$0xff]
    %v362 = vld [vmem:[#allocation2 + $0x19] sm:$0xff]
    %v363 = vld [vmem:[#allocation2 + $0x21] sm:$0xff]
    %v364 = vld [vmem:[#allocation2 + $0x29] sm:$0xff]
    %v365 = vld [vmem:[#allocation2 + $0x31] sm:$0xff]
    %v366 = vld [vmem:[#allocation8 + $0x80] sm:$0xff]
    %v367 = vld [vmem:[#allocation8 + $0x88] sm:$0xff]
    %v368 = vld [vmem:[#allocation8 + $0x90] sm:$0xff]
    %v369 = vld [vmem:[#allocation8 + $0x98] sm:$0xff]
    %v370 = vld [vmem:[#allocation8 + $0xa0] sm:$0xff]
    %v371 = vld [vmem:[#allocation8 + $0xa8] sm:$0xff]
    %v372 = vld [vmem:[#allocation8 + $0xb0] sm:$0xff]
    %v373 = vld [vmem:[#allocation8 + $0xb8] sm:$0xff]
    %v375 = vsel %vm91, %v360, 0
    %v378 = vsel %vm91, %v361, 0
    %v381 = vsel %vm91, %v362, 0
    %v384 = vsel %vm91, %v363, 0
    %v387 = vsel %vm91, %v364, 0
    %v390 = vsel %vm91, %v365, 0
    %392 = vmatprep.subr.mxu0 0.0
    %393 = vmatpush1.msra.mxu0 0.0
    %394 = vmatprep.subr.mxu0 0.0
    %395 = vmatpush1.msra.mxu0 0.0
    %396 = vmatprep.subr.mxu0 0.0
    %397 = vmatpush1.msra.mxu0 0.0
    %398 = vmatprep.subr.mxu0 0.0
    %399 = vmatpush1.msra.mxu0 0.0
    %400 = vmatprep.subr.mxu0 0.0
    %401 = vmatpush1.msra.mxu0 0.0
    %402 = vmatprep.subr.mxu0 0.0
    %403 = vmatpush1.msra.mxu0 0.0
    %404 = vmatprep.subr.mxu0 0.0
    %405 = vmatpush1.msra.mxu0 0.0
    %406 = vmatprep.subr.mxu0 0.0
    %407 = vmatpush1.msra.mxu0 0.0
    %408 = vmatprep.subr.mxu0 0.0
    %409 = vmatpush1.msra.mxu0 %v373
    %410 = vmatprep.subr.mxu0 0.0
    %411 = vmatpush1.msra.mxu0 %v372
    %412 = vmatprep.subr.mxu0 0.0
    %413 = vmatpush1.msra.mxu0 %v371
    %414 = vmatprep.subr.mxu0 0.0
    %415 = vmatpush1.msra.mxu0 %v370
    %416 = vmatprep.subr.mxu0 0.0
    %417 = vmatpush1.msra.mxu0 %v369
    %418 = vmatprep.subr.mxu0 0.0
    %419 = vmatpush1.msra.mxu0 %v368
    %420 = vmatprep.subr.mxu0 0.0
    %421 = vmatpush1.msra.mxu0 %v367
    %422 = vmatprep.subr.mxu0 0.0
    %423 = vmatpush1.msra.mxu0 %v366
    %424 = vmatprep.subr.mxu0 0.0
    %425 = vmatpush2.msra.mxu0 0.0
    %426 = vmatprep.subr.mxu0 0.0
    %427 = vmatpush2.msra.mxu0 0.0
    %428 = vmatprep.subr.mxu0 0.0
    %429 = vmatpush2.msra.mxu0 0.0
    %430 = vmatprep.subr.mxu0 0.0
    %431 = vmatpush2.msra.mxu0 0.0
    %432 = vmatprep.subr.mxu0 0.0
    %433 = vmatpush2.msra.mxu0 0.0
    %434 = vmatprep.subr.mxu0 0.0
    %435 = vmatpush2.msra.mxu0 0.0
    %436 = vmatprep.subr.mxu0 0.0
    %437 = vmatpush2.msra.mxu0 0.0
    %438 = vmatprep.subr.mxu0 0.0
    %439 = vmatpush2.msra.mxu0 0.0
    %440 = vmatprep.subr.mxu0 0.0
    %441 = vmatpush2.msra.mxu0 0.0
    %442 = vmatprep.subr.mxu0 0.0
    %443 = vmatpush2.msra.mxu0 0.0
    %444 = vmatprep.subr.mxu0 0.0
    %445 = vmatpush2.msra.mxu0 0.0
    %446 = vmatprep.subr.mxu0 0.0
    %447 = vmatpush2.msra.mxu0 0.0
    %448 = vmatprep.subr.mxu0 0.0
    %449 = vmatpush2.msra.mxu0 0.0
    %450 = vmatprep.subr.mxu0 0.0
    %451 = vmatpush2.msra.mxu0 0.0
    %452 = vmatprep.subr.mxu0 0.0
    %453 = vmatpush2.msra.mxu0 0.0
    %454 = vmatprep.subr.mxu0 0.0
    %455 = vmatpush2.msra.mxu0 0.0
    %456 = vmatprep.mubr.f32.mxu0 0.0
    %457 = vmatmul.mubr.f32.gmra.mxu0 %v375
    %v458 = vpop.f32.mrf.mxu0
    %v459 = vadd.f32 0.0, %v458
    %v460 = vpop.f32.mrf.mxu0
    %461 = vmatprep.mubr.f32.mxu0 0.0
    %462 = vmatmul.mubr.f32.gmra.mxu0 %v378
    %v463 = vpop.f32.mrf.mxu0
    %v464 = vadd.f32 0.0, %v463
    %v465 = vpop.f32.mrf.mxu0
    %466 = vmatprep.mubr.f32.mxu0 0.0
    %467 = vmatmul.mubr.f32.gmra.mxu0 %v381
    %v468 = vpop.f32.mrf.mxu0
    %v469 = vpop.f32.mrf.mxu0
    %470 = vmatprep.mubr.f32.mxu0 0.0
    %471 = vmatmul.mubr.f32.gmra.mxu0 %v384
    %v472 = vpop.f32.mrf.mxu0
    %v473 = vadd.f32 0.0, %v472
    %v474 = vpop.f32.mrf.mxu0
    %475 = vmatprep.mubr.f32.mxu0 0.0
    %476 = vmatmul.mubr.f32.gmra.mxu0 %v387
    %v477 = vpop.f32.mrf.mxu0
    %v478 = vadd.f32 0.0, %v477
    %v479 = vpop.f32.mrf.mxu0
    %480 = vmatprep.mubr.f32.mxu0 0.0
    %481 = vmatmul.mubr.f32.gmra.mxu0 %v390
    %v482 = vpop.f32.mrf.mxu0
    %v483 = vpop.f32.mrf.mxu0
    %484 = vdwg.mxu0
    %v485 = vadd.f32 %v334, %v459
    %v486 = vadd.f32 %v339, %v464
    %v487 = vadd.f32 %v348, %v473
    %v488 = vadd.f32 %v353, %v478
    %v489 = vld [vmem:[%s2] sm:$0x1]
    %v491 = vlaneseq
    %v492 = vshrl.u32 %v491, 7
    %v493 = vsub.s32 0, %v492
    %v494 = vrot.slane %v489, %v493
    %v496 = vmul.f32 %v485, %v494
    %v497 = vmul.f32 %v486, %v494
    %v498 = vmul.f32 %v487, %v494
    %v499 = vmul.f32 %v488, %v494
    %v500 = vld [vmem:[%s3] sm:$0x1]
    %v502 = vlaneseq
    %v503 = vshrl.u32 %v502, 7
    %v504 = vsub.s32 0, %v503
    %v505 = vrot.slane %v500, %v504
    %v507 = vadd.f32 %v496, %v505
    %v508 = vadd.f32 %v497, %v505
    %v509 = vadd.f32 %v498, %v505
    %v510 = vadd.f32 %v499, %v505
    %v511 = vmax.f32 %v507, 0.0
    %v512 = vmax.f32 %v508, 0.0
    %v513 = vmax.f32 %v509, 0.0
    %v514 = vmax.f32 %v510, 0.0
    %515 = vst [vmem:[#allocation3 + $0x8] sm:$0xff] %v511
    %516 = vst [vmem:[#allocation3 + $0x10] sm:$0xff] %v512
    %517 = vst [vmem:[#allocation3 + $0x20] sm:$0xff] %v513
    %518 = vst [vmem:[#allocation3 + $0x28] sm:$0xff] %v514
    %v519 = vld [vmem:[#allocation3 + $0x7] sm:$0xff]
    %v520 = vld [vmem:[#allocation3 + $0xf] sm:$0xff]
    %v521 = vld [vmem:[#allocation3 + $0x17] sm:$0xff]
    %v522 = vld [vmem:[#allocation3 + $0x1f] sm:$0xff]
    %v523 = vld [vmem:[#allocation3 + $0x27] sm:$0xff]
    %v524 = vld [vmem:[#allocation3 + $0x2f] sm:$0xff]
    %v525 = vld [vmem:[#allocation3 + $0x8] sm:$0xff]
    %v526 = vld [vmem:[#allocation3 + $0x10] sm:$0xff]
    %v527 = vld [vmem:[#allocation3 + $0x18] sm:$0xff]
    %v528 = vld [vmem:[#allocation3 + $0x20] sm:$0xff]
    %v529 = vld [vmem:[#allocation3 + $0x28] sm:$0xff]
    %v530 = vld [vmem:[#allocation3 + $0x30] sm:$0xff]
    %v531 = vld [vmem:[#allocation3 + $0x9] sm:$0xff]
    %v532 = vld [vmem:[#allocation3 + $0x11] sm:$0xff]
    %v533 = vld [vmem:[#allocation3 + $0x19] sm:$0xff]
    %v534 = vld [vmem:[#allocation3 + $0x21] sm:$0xff]
    %v535 = vld [vmem:[#allocation3 + $0x29] sm:$0xff]
    %v536 = vld [vmem:[#allocation3 + $0x31] sm:$0xff]
    %v537 = vld [vmem:[#allocation10] sm:$0xff]
    %v538 = vld [vmem:[#allocation10 + $0x8] sm:$0xff]
    %v539 = vld [vmem:[#allocation10 + $0x10] sm:$0xff]
    %v540 = vld [vmem:[#allocation10 + $0x18] sm:$0xff]
    %v541 = vld [vmem:[#allocation10 + $0x20] sm:$0xff]
    %v542 = vld [vmem:[#allocation10 + $0x28] sm:$0xff]
    %v543 = vld [vmem:[#allocation10 + $0x30] sm:$0xff]
    %v544 = vld [vmem:[#allocation10 + $0x38] sm:$0xff]
    %v545 = vld [vmem:[#allocation10 + $0x40] sm:$0xff]
    %v546 = vld [vmem:[#allocation10 + $0x48] sm:$0xff]
    %v547 = vld [vmem:[#allocation10 + $0x50] sm:$0xff]
    %v548 = vld [vmem:[#allocation10 + $0x58] sm:$0xff]
    %v549 = vld [vmem:[#allocation10 + $0x60] sm:$0xff]
    %v550 = vld [vmem:[#allocation10 + $0x68] sm:$0xff]
    %v551 = vld [vmem:[#allocation10 + $0x70] sm:$0xff]
    %v552 = vld [vmem:[#allocation10 + $0x78] sm:$0xff]
    %v553 = vld [vmem:[#allocation10 + $0x80] sm:$0xff]
    %v554 = vld [vmem:[#allocation10 + $0x88] sm:$0xff]
    %v555 = vld [vmem:[#allocation10 + $0x90] sm:$0xff]
    %v556 = vld [vmem:[#allocation10 + $0x98] sm:$0xff]
    %v557 = vld [vmem:[#allocation10 + $0xa0] sm:$0xff]
    %v558 = vld [vmem:[#allocation10 + $0xa8] sm:$0xff]
    %v559 = vld [vmem:[#allocation10 + $0xb0] sm:$0xff]
    %v560 = vld [vmem:[#allocation10 + $0xb8] sm:$0xff]
    %v561 = vld [vmem:[#allocation10 + $0xc0] sm:$0xff]
    %v562 = vld [vmem:[#allocation10 + $0xc8] sm:$0xff]
    %v563 = vld [vmem:[#allocation10 + $0xd0] sm:$0xff]
    %v564 = vld [vmem:[#allocation10 + $0xd8] sm:$0xff]
    %v565 = vld [vmem:[#allocation10 + $0xe0] sm:$0xff]
    %v566 = vld [vmem:[#allocation10 + $0xe8] sm:$0xff]
    %v567 = vld [vmem:[#allocation10 + $0xf0] sm:$0xff]
    %v568 = vld [vmem:[#allocation10 + $0xf8] sm:$0xff]
    %v569 = vld [vmem:[#allocation10 + $0x100] sm:$0xff]
    %v570 = vld [vmem:[#allocation10 + $0x108] sm:$0xff]
    %v571 = vld [vmem:[#allocation10 + $0x110] sm:$0xff]
    %v572 = vld [vmem:[#allocation10 + $0x118] sm:$0xff]
    %v573 = vld [vmem:[#allocation10 + $0x120] sm:$0xff]
    %v574 = vld [vmem:[#allocation10 + $0x128] sm:$0xff]
    %v575 = vld [vmem:[#allocation10 + $0x130] sm:$0xff]
    %v576 = vld [vmem:[#allocation10 + $0x138] sm:$0xff]
    %v577 = vld [vmem:[#allocation10 + $0x140] sm:$0xff]
    %v578 = vld [vmem:[#allocation10 + $0x148] sm:$0xff]
    %v579 = vld [vmem:[#allocation10 + $0x150] sm:$0xff]
    %v580 = vld [vmem:[#allocation10 + $0x158] sm:$0xff]
    %v581 = vld [vmem:[#allocation10 + $0x160] sm:$0xff]
    %v582 = vld [vmem:[#allocation10 + $0x168] sm:$0xff]
    %v583 = vld [vmem:[#allocation10 + $0x170] sm:$0xff]
    %v584 = vld [vmem:[#allocation10 + $0x178] sm:$0xff]
    %585 = vmatprep.subr.mxu0 0.0
    %586 = vmatpush1.msra.mxu0 %v552
    %587 = vmatprep.subr.mxu0 0.0
    %588 = vmatpush1.msra.mxu0 %v551
    %589 = vmatprep.subr.mxu0 0.0
    %590 = vmatpush1.msra.mxu0 %v550
    %591 = vmatprep.subr.mxu0 0.0
    %592 = vmatpush1.msra.mxu0 %v549
    %593 = vmatprep.subr.mxu0 0.0
    %594 = vmatpush1.msra.mxu0 %v548
    %595 = vmatprep.subr.mxu0 0.0
    %596 = vmatpush1.msra.mxu0 %v547
    %597 = vmatprep.subr.mxu0 0.0
    %598 = vmatpush1.msra.mxu0 %v546
    %599 = vmatprep.subr.mxu0 0.0
    %600 = vmatpush1.msra.mxu0 %v545
    %601 = vmatprep.subr.mxu0 0.0
    %602 = vmatpush1.msra.mxu0 %v544
    %603 = vmatprep.subr.mxu0 0.0
    %604 = vmatpush1.msra.mxu0 %v543
    %605 = vmatprep.subr.mxu0 0.0
    %606 = vmatpush1.msra.mxu0 %v542
    %607 = vmatprep.subr.mxu0 0.0
    %608 = vmatpush1.msra.mxu0 %v541
    %609 = vmatprep.subr.mxu0 0.0
    %610 = vmatpush1.msra.mxu0 %v540
    %611 = vmatprep.subr.mxu0 0.0
    %612 = vmatpush1.msra.mxu0 %v539
    %613 = vmatprep.subr.mxu0 0.0
    %614 = vmatpush1.msra.mxu0 %v538
    %615 = vmatprep.subr.mxu0 0.0
    %616 = vmatpush1.msra.mxu0 %v537
    %617 = vmatprep.subr.mxu0 0.0
    %618 = vmatpush2.msra.mxu0 %v568
    %619 = vmatprep.subr.mxu0 0.0
    %620 = vmatpush2.msra.mxu0 %v567
    %621 = vmatprep.subr.mxu0 0.0
    %622 = vmatpush2.msra.mxu0 %v566
    %623 = vmatprep.subr.mxu0 0.0
    %624 = vmatpush2.msra.mxu0 %v565
    %625 = vmatprep.subr.mxu0 0.0
    %626 = vmatpush2.msra.mxu0 %v564
    %627 = vmatprep.subr.mxu0 0.0
    %628 = vmatpush2.msra.mxu0 %v563
    %629 = vmatprep.subr.mxu0 0.0
    %630 = vmatpush2.msra.mxu0 %v562
    %631 = vmatprep.subr.mxu0 0.0
    %632 = vmatpush2.msra.mxu0 %v561
    %633 = vmatprep.subr.mxu0 0.0
    %634 = vmatpush2.msra.mxu0 %v560
    %635 = vmatprep.subr.mxu0 0.0
    %636 = vmatpush2.msra.mxu0 %v559
    %637 = vmatprep.subr.mxu0 0.0
    %638 = vmatpush2.msra.mxu0 %v558
    %639 = vmatprep.subr.mxu0 0.0
    %640 = vmatpush2.msra.mxu0 %v557
    %641 = vmatprep.subr.mxu0 0.0
    %642 = vmatpush2.msra.mxu0 %v556
    %643 = vmatprep.subr.mxu0 0.0
    %644 = vmatpush2.msra.mxu0 %v555
    %645 = vmatprep.subr.mxu0 0.0
    %646 = vmatpush2.msra.mxu0 %v554
    %647 = vmatprep.subr.mxu0 0.0
    %648 = vmatpush2.msra.mxu0 %v553
    %649 = vmatprep.mubr.f32.mxu0 %v525
    %650 = vmatmul.mubr.f32.gmra.mxu0 %v519
    %v651 = vpop.f32.mrf.mxu0
    %v652 = vadd.f32 0.0, %v651
    %v653 = vpop.f32.mrf.mxu0
    %654 = vmatprep.mubr.f32.mxu0 %v526
    %655 = vmatmul.mubr.f32.gmra.mxu0 %v520
    %v656 = vpop.f32.mrf.mxu0
    %v657 = vadd.f32 0.0, %v656
    %v658 = vpop.f32.mrf.mxu0
    %659 = vmatprep.mubr.f32.mxu0 %v527
    %660 = vmatmul.mubr.f32.gmra.mxu0 %v521
    %v661 = vpop.f32.mrf.mxu0
    %v662 = vpop.f32.mrf.mxu0
    %663 = vmatprep.mubr.f32.mxu0 %v528
    %664 = vmatmul.mubr.f32.gmra.mxu0 %v522
    %v665 = vpop.f32.mrf.mxu0
    %v666 = vadd.f32 0.0, %v665
    %v667 = vpop.f32.mrf.mxu0
    %668 = vmatprep.mubr.f32.mxu0 %v529
    %669 = vmatmul.mubr.f32.gmra.mxu0 %v523
    %v670 = vpop.f32.mrf.mxu0
    %v671 = vadd.f32 0.0, %v670
    %v672 = vpop.f32.mrf.mxu0
    %673 = vmatprep.mubr.f32.mxu0 %v530
    %674 = vmatmul.mubr.f32.gmra.mxu0 %v524
    %v675 = vpop.f32.mrf.mxu0
    %v676 = vpop.f32.mrf.mxu0
    %677 = vdwg.mxu0
    %678 = vmatprep.subr.mxu0 0.0
    %679 = vmatpush1.msra.mxu0 %v584
    %680 = vmatprep.subr.mxu0 0.0
    %681 = vmatpush1.msra.mxu0 %v583
    %682 = vmatprep.subr.mxu0 0.0
    %683 = vmatpush1.msra.mxu0 %v582
    %684 = vmatprep.subr.mxu0 0.0
    %685 = vmatpush1.msra.mxu0 %v581
    %686 = vmatprep.subr.mxu0 0.0
    %687 = vmatpush1.msra.mxu0 %v580
    %688 = vmatprep.subr.mxu0 0.0
    %689 = vmatpush1.msra.mxu0 %v579
    %690 = vmatprep.subr.mxu0 0.0
    %691 = vmatpush1.msra.mxu0 %v578
    %692 = vmatprep.subr.mxu0 0.0
    %693 = vmatpush1.msra.mxu0 %v577
    %694 = vmatprep.subr.mxu0 0.0
    %695 = vmatpush1.msra.mxu0 %v576
    %696 = vmatprep.subr.mxu0 0.0
    %697 = vmatpush1.msra.mxu0 %v575
    %698 = vmatprep.subr.mxu0 0.0
    %699 = vmatpush1.msra.mxu0 %v574
    %700 = vmatprep.subr.mxu0 0.0
    %701 = vmatpush1.msra.mxu0 %v573
    %702 = vmatprep.subr.mxu0 0.0
    %703 = vmatpush1.msra.mxu0 %v572
    %704 = vmatprep.subr.mxu0 0.0
    %705 = vmatpush1.msra.mxu0 %v571
    %706 = vmatprep.subr.mxu0 0.0
    %707 = vmatpush1.msra.mxu0 %v570
    %708 = vmatprep.subr.mxu0 0.0
    %709 = vmatpush1.msra.mxu0 %v569
    %710 = vmatprep.subr.mxu0 0.0
    %711 = vmatpush2.msra.mxu0 0.0
    %712 = vmatprep.subr.mxu0 0.0
    %713 = vmatpush2.msra.mxu0 0.0
    %714 = vmatprep.subr.mxu0 0.0
    %715 = vmatpush2.msra.mxu0 0.0
    %716 = vmatprep.subr.mxu0 0.0
    %717 = vmatpush2.msra.mxu0 0.0
    %718 = vmatprep.subr.mxu0 0.0
    %719 = vmatpush2.msra.mxu0 0.0
    %720 = vmatprep.subr.mxu0 0.0
    %721 = vmatpush2.msra.mxu0 0.0
    %722 = vmatprep.subr.mxu0 0.0
    %723 = vmatpush2.msra.mxu0 0.0
    %724 = vmatprep.subr.mxu0 0.0
    %725 = vmatpush2.msra.mxu0 0.0
    %726 = vmatprep.subr.mxu0 0.0
    %727 = vmatpush2.msra.mxu0 0.0
    %728 = vmatprep.subr.mxu0 0.0
    %729 = vmatpush2.msra.mxu0 0.0
    %730 = vmatprep.subr.mxu0 0.0
    %731 = vmatpush2.msra.mxu0 0.0
    %732 = vmatprep.subr.mxu0 0.0
    %733 = vmatpush2.msra.mxu0 0.0
    %734 = vmatprep.subr.mxu0 0.0
    %735 = vmatpush2.msra.mxu0 0.0
    %736 = vmatprep.subr.mxu0 0.0
    %737 = vmatpush2.msra.mxu0 0.0
    %738 = vmatprep.subr.mxu0 0.0
    %739 = vmatpush2.msra.mxu0 0.0
    %740 = vmatprep.subr.mxu0 0.0
    %741 = vmatpush2.msra.mxu0 0.0
    %742 = vmatprep.mubr.f32.mxu0 0.0
    %743 = vmatmul.mubr.f32.gmra.mxu0 %v531
    %v744 = vpop.f32.mrf.mxu0
    %v745 = vadd.f32 %v652, %v744
    %v746 = vpop.f32.mrf.mxu0
    %747 = vmatprep.mubr.f32.mxu0 0.0
    %748 = vmatmul.mubr.f32.gmra.mxu0 %v532
    %v749 = vpop.f32.mrf.mxu0
    %v750 = vadd.f32 %v657, %v749
    %v751 = vpop.f32.mrf.mxu0
    %752 = vmatprep.mubr.f32.mxu0 0.0
    %753 = vmatmul.mubr.f32.gmra.mxu0 %v533
    %v754 = vpop.f32.mrf.mxu0
    %v755 = vpop.f32.mrf.mxu0
    %756 = vmatprep.mubr.f32.mxu0 0.0
    %757 = vmatmul.mubr.f32.gmra.mxu0 %v534
    %v758 = vpop.f32.mrf.mxu0
    %v759 = vadd.f32 %v666, %v758
    %v760 = vpop.f32.mrf.mxu0
    %761 = vmatprep.mubr.f32.mxu0 0.0
    %762 = vmatmul.mubr.f32.gmra.mxu0 %v535
    %v763 = vpop.f32.mrf.mxu0
    %v764 = vadd.f32 %v671, %v763
    %v765 = vpop.f32.mrf.mxu0
    %766 = vmatprep.mubr.f32.mxu0 0.0
    %767 = vmatmul.mubr.f32.gmra.mxu0 %v536
    %v768 = vpop.f32.mrf.mxu0
    %v769 = vpop.f32.mrf.mxu0
    %770 = vdwg.mxu0
    %v771 = vld [vmem:[%s5] sm:$0x1]
    %v773 = vlaneseq
    %v774 = vshrl.u32 %v773, 7
    %v775 = vsub.s32 0, %v774
    %v776 = vrot.slane %v771, %v775
    %v778 = vmul.f32 %v745, %v776
    %v779 = vmul.f32 %v750, %v776
    %v780 = vmul.f32 %v759, %v776
    %v781 = vmul.f32 %v764, %v776
    %v782 = vld [vmem:[%s6] sm:$0x1]
    %v784 = vlaneseq
    %v785 = vshrl.u32 %v784, 7
    %v786 = vsub.s32 0, %v785
    %v787 = vrot.slane %v782, %v786
    %v789 = vadd.f32 %v778, %v787
    %v790 = vadd.f32 %v779, %v787
    %v791 = vadd.f32 %v780, %v787
    %v792 = vadd.f32 %v781, %v787
    %v793 = vmax.f32 %v789, 0.0
    %v794 = vmax.f32 %v790, 0.0
    %v795 = vmax.f32 %v791, 0.0
    %v796 = vmax.f32 %v792, 0.0
    %797 = vst [vmem:[#allocation4 + $0x8] sm:$0xff] %v793
    %798 = vst [vmem:[#allocation4 + $0x10] sm:$0xff] %v794
    %799 = vst [vmem:[#allocation4 + $0x20] sm:$0xff] %v795
    %800 = vst [vmem:[#allocation4 + $0x28] sm:$0xff] %v796
    %v801 = vld [vmem:[#allocation4 + $0x7] sm:$0xff]
    %v802 = vld [vmem:[#allocation4 + $0xf] sm:$0xff]
    %v803 = vld [vmem:[#allocation4 + $0x17] sm:$0xff]
    %v804 = vld [vmem:[#allocation4 + $0x1f] sm:$0xff]
    %v805 = vld [vmem:[#allocation4 + $0x27] sm:$0xff]
    %v806 = vld [vmem:[#allocation4 + $0x2f] sm:$0xff]
    %v807 = vld [vmem:[#allocation4 + $0x8] sm:$0xff]
    %v808 = vld [vmem:[#allocation4 + $0x10] sm:$0xff]
    %v809 = vld [vmem:[#allocation4 + $0x18] sm:$0xff]
    %v810 = vld [vmem:[#allocation4 + $0x20] sm:$0xff]
    %v811 = vld [vmem:[#allocation4 + $0x28] sm:$0xff]
    %v812 = vld [vmem:[#allocation4 + $0x30] sm:$0xff]
    %v813 = vld [vmem:[#allocation4 + $0x9] sm:$0xff]
    %v814 = vld [vmem:[#allocation4 + $0x11] sm:$0xff]
    %v815 = vld [vmem:[#allocation4 + $0x19] sm:$0xff]
    %v816 = vld [vmem:[#allocation4 + $0x21] sm:$0xff]
    %v817 = vld [vmem:[#allocation4 + $0x29] sm:$0xff]
    %v818 = vld [vmem:[#allocation4 + $0x31] sm:$0xff]
    %v819 = vld [vmem:[#allocation11] sm:$0xff]
    %v820 = vld [vmem:[#allocation11 + $0x8] sm:$0xff]
    %v821 = vld [vmem:[#allocation11 + $0x10] sm:$0xff]
    %v822 = vld [vmem:[#allocation11 + $0x18] sm:$0xff]
    %v823 = vld [vmem:[#allocation11 + $0x20] sm:$0xff]
    %v824 = vld [vmem:[#allocation11 + $0x28] sm:$0xff]
    %v825 = vld [vmem:[#allocation11 + $0x30] sm:$0xff]
    %v826 = vld [vmem:[#allocation11 + $0x38] sm:$0xff]
    %v827 = vld [vmem:[#allocation11 + $0x40] sm:$0xff]
    %v828 = vld [vmem:[#allocation11 + $0x48] sm:$0xff]
    %v829 = vld [vmem:[#allocation11 + $0x50] sm:$0xff]
    %v830 = vld [vmem:[#allocation11 + $0x58] sm:$0xff]
    %v831 = vld [vmem:[#allocation11 + $0x60] sm:$0xff]
    %v832 = vld [vmem:[#allocation11 + $0x68] sm:$0xff]
    %v833 = vld [vmem:[#allocation11 + $0x70] sm:$0xff]
    %v834 = vld [vmem:[#allocation11 + $0x78] sm:$0xff]
    %v835 = vld [vmem:[#allocation11 + $0x80] sm:$0xff]
    %v836 = vld [vmem:[#allocation11 + $0x88] sm:$0xff]
    %v837 = vld [vmem:[#allocation11 + $0x90] sm:$0xff]
    %v838 = vld [vmem:[#allocation11 + $0x98] sm:$0xff]
    %v839 = vld [vmem:[#allocation11 + $0xa0] sm:$0xff]
    %v840 = vld [vmem:[#allocation11 + $0xa8] sm:$0xff]
    %v841 = vld [vmem:[#allocation11 + $0xb0] sm:$0xff]
    %v842 = vld [vmem:[#allocation11 + $0xb8] sm:$0xff]
    %v843 = vld [vmem:[#allocation11 + $0xc0] sm:$0xff]
    %v844 = vld [vmem:[#allocation11 + $0xc8] sm:$0xff]
    %v845 = vld [vmem:[#allocation11 + $0xd0] sm:$0xff]
    %v846 = vld [vmem:[#allocation11 + $0xd8] sm:$0xff]
    %v847 = vld [vmem:[#allocation11 + $0xe0] sm:$0xff]
    %v848 = vld [vmem:[#allocation11 + $0xe8] sm:$0xff]
    %v849 = vld [vmem:[#allocation11 + $0xf0] sm:$0xff]
    %v850 = vld [vmem:[#allocation11 + $0xf8] sm:$0xff]
    %v851 = vld [vmem:[#allocation11 + $0x100] sm:$0xff]
    %v852 = vld [vmem:[#allocation11 + $0x108] sm:$0xff]
    %v853 = vld [vmem:[#allocation11 + $0x110] sm:$0xff]
    %v854 = vld [vmem:[#allocation11 + $0x118] sm:$0xff]
    %v855 = vld [vmem:[#allocation11 + $0x120] sm:$0xff]
    %v856 = vld [vmem:[#allocation11 + $0x128] sm:$0xff]
    %v857 = vld [vmem:[#allocation11 + $0x130] sm:$0xff]
    %v858 = vld [vmem:[#allocation11 + $0x138] sm:$0xff]
    %v859 = vld [vmem:[#allocation11 + $0x140] sm:$0xff]
    %v860 = vld [vmem:[#allocation11 + $0x148] sm:$0xff]
    %v861 = vld [vmem:[#allocation11 + $0x150] sm:$0xff]
    %v862 = vld [vmem:[#allocation11 + $0x158] sm:$0xff]
    %v863 = vld [vmem:[#allocation11 + $0x160] sm:$0xff]
    %v864 = vld [vmem:[#allocation11 + $0x168] sm:$0xff]
    %v865 = vld [vmem:[#allocation11 + $0x170] sm:$0xff]
    %v866 = vld [vmem:[#allocation11 + $0x178] sm:$0xff]
    %867 = vmatprep.subr.mxu0 0.0
    %868 = vmatpush1.msra.mxu0 %v834
    %869 = vmatprep.subr.mxu0 0.0
    %870 = vmatpush1.msra.mxu0 %v833
    %871 = vmatprep.subr.mxu0 0.0
    %872 = vmatpush1.msra.mxu0 %v832
    %873 = vmatprep.subr.mxu0 0.0
    %874 = vmatpush1.msra.mxu0 %v831
    %875 = vmatprep.subr.mxu0 0.0
    %876 = vmatpush1.msra.mxu0 %v830
    %877 = vmatprep.subr.mxu0 0.0
    %878 = vmatpush1.msra.mxu0 %v829
    %879 = vmatprep.subr.mxu0 0.0
    %880 = vmatpush1.msra.mxu0 %v828
    %881 = vmatprep.subr.mxu0 0.0
    %882 = vmatpush1.msra.mxu0 %v827
    %883 = vmatprep.subr.mxu0 0.0
    %884 = vmatpush1.msra.mxu0 %v826
    %885 = vmatprep.subr.mxu0 0.0
    %886 = vmatpush1.msra.mxu0 %v825
    %887 = vmatprep.subr.mxu0 0.0
    %888 = vmatpush1.msra.mxu0 %v824
    %889 = vmatprep.subr.mxu0 0.0
    %890 = vmatpush1.msra.mxu0 %v823
    %891 = vmatprep.subr.mxu0 0.0
    %892 = vmatpush1.msra.mxu0 %v822
    %893 = vmatprep.subr.mxu0 0.0
    %894 = vmatpush1.msra.mxu0 %v821
    %895 = vmatprep.subr.mxu0 0.0
    %896 = vmatpush1.msra.mxu0 %v820
    %897 = vmatprep.subr.mxu0 0.0
    %898 = vmatpush1.msra.mxu0 %v819
    %899 = vmatprep.subr.mxu0 0.0
    %900 = vmatpush2.msra.mxu0 %v850
    %901 = vmatprep.subr.mxu0 0.0
    %902 = vmatpush2.msra.mxu0 %v849
    %903 = vmatprep.subr.mxu0 0.0
    %904 = vmatpush2.msra.mxu0 %v848
    %905 = vmatprep.subr.mxu0 0.0
    %906 = vmatpush2.msra.mxu0 %v847
    %907 = vmatprep.subr.mxu0 0.0
    %908 = vmatpush2.msra.mxu0 %v846
    %909 = vmatprep.subr.mxu0 0.0
    %910 = vmatpush2.msra.mxu0 %v845
    %911 = vmatprep.subr.mxu0 0.0
    %912 = vmatpush2.msra.mxu0 %v844
    %913 = vmatprep.subr.mxu0 0.0
    %914 = vmatpush2.msra.mxu0 %v843
    %915 = vmatprep.subr.mxu0 0.0
    %916 = vmatpush2.msra.mxu0 %v842
    %917 = vmatprep.subr.mxu0 0.0
    %918 = vmatpush2.msra.mxu0 %v841
    %919 = vmatprep.subr.mxu0 0.0
    %920 = vmatpush2.msra.mxu0 %v840
    %921 = vmatprep.subr.mxu0 0.0
    %922 = vmatpush2.msra.mxu0 %v839
    %923 = vmatprep.subr.mxu0 0.0
    %924 = vmatpush2.msra.mxu0 %v838
    %925 = vmatprep.subr.mxu0 0.0
    %926 = vmatpush2.msra.mxu0 %v837
    %927 = vmatprep.subr.mxu0 0.0
    %928 = vmatpush2.msra.mxu0 %v836
    %929 = vmatprep.subr.mxu0 0.0
    %930 = vmatpush2.msra.mxu0 %v835
    %931 = vmatprep.mubr.f32.mxu0 %v807
    %932 = vmatmul.mubr.f32.gmra.mxu0 %v801
    %v933 = vpop.f32.mrf.mxu0
    %v934 = vadd.f32 0.0, %v933
    %v935 = vpop.f32.mrf.mxu0
    %936 = vmatprep.mubr.f32.mxu0 %v808
    %937 = vmatmul.mubr.f32.gmra.mxu0 %v802
    %v938 = vpop.f32.mrf.mxu0
    %v939 = vadd.f32 0.0, %v938
    %v940 = vpop.f32.mrf.mxu0
    %941 = vmatprep.mubr.f32.mxu0 %v809
    %942 = vmatmul.mubr.f32.gmra.mxu0 %v803
    %v943 = vpop.f32.mrf.mxu0
    %v944 = vpop.f32.mrf.mxu0
    %945 = vmatprep.mubr.f32.mxu0 %v810
    %946 = vmatmul.mubr.f32.gmra.mxu0 %v804
    %v947 = vpop.f32.mrf.mxu0
    %v948 = vadd.f32 0.0, %v947
    %v949 = vpop.f32.mrf.mxu0
    %950 = vmatprep.mubr.f32.mxu0 %v811
    %951 = vmatmul.mubr.f32.gmra.mxu0 %v805
    %v952 = vpop.f32.mrf.mxu0
    %v953 = vadd.f32 0.0, %v952
    %v954 = vpop.f32.mrf.mxu0
    %955 = vmatprep.mubr.f32.mxu0 %v812
    %956 = vmatmul.mubr.f32.gmra.mxu0 %v806
    %v957 = vpop.f32.mrf.mxu0
    %v958 = vpop.f32.mrf.mxu0
    %959 = vdwg.mxu0
    %960 = vmatprep.subr.mxu0 0.0
    %961 = vmatpush1.msra.mxu0 %v866
    %962 = vmatprep.subr.mxu0 0.0
    %963 = vmatpush1.msra.mxu0 %v865
    %964 = vmatprep.subr.mxu0 0.0
    %965 = vmatpush1.msra.mxu0 %v864
    %966 = vmatprep.subr.mxu0 0.0
    %967 = vmatpush1.msra.mxu0 %v863
    %968 = vmatprep.subr.mxu0 0.0
    %969 = vmatpush1.msra.mxu0 %v862
    %970 = vmatprep.subr.mxu0 0.0
    %971 = vmatpush1.msra.mxu0 %v861
    %972 = vmatprep.subr.mxu0 0.0
    %973 = vmatpush1.msra.mxu0 %v860
    %974 = vmatprep.subr.mxu0 0.0
    %975 = vmatpush1.msra.mxu0 %v859
    %976 = vmatprep.subr.mxu0 0.0
    %977 = vmatpush1.msra.mxu0 %v858
    %978 = vmatprep.subr.mxu0 0.0
    %979 = vmatpush1.msra.mxu0 %v857
    %980 = vmatprep.subr.mxu0 0.0
    %981 = vmatpush1.msra.mxu0 %v856
    %982 = vmatprep.subr.mxu0 0.0
    %983 = vmatpush1.msra.mxu0 %v855
    %984 = vmatprep.subr.mxu0 0.0
    %985 = vmatpush1.msra.mxu0 %v854
    %986 = vmatprep.subr.mxu0 0.0
    %987 = vmatpush1.msra.mxu0 %v853
    %988 = vmatprep.subr.mxu0 0.0
    %989 = vmatpush1.msra.mxu0 %v852
    %990 = vmatprep.subr.mxu0 0.0
    %991 = vmatpush1.msra.mxu0 %v851
    %992 = vmatprep.subr.mxu0 0.0
    %993 = vmatpush2.msra.mxu0 0.0
    %994 = vmatprep.subr.mxu0 0.0
    %995 = vmatpush2.msra.mxu0 0.0
    %996 = vmatprep.subr.mxu0 0.0
    %997 = vmatpush2.msra.mxu0 0.0
    %998 = vmatprep.subr.mxu0 0.0
    %999 = vmatpush2.msra.mxu0 0.0
    %1000 = vmatprep.subr.mxu0 0.0
    %1001 = vmatpush2.msra.mxu0 0.0
    %1002 = vmatprep.subr.mxu0 0.0
    %1003 = vmatpush2.msra.mxu0 0.0
    %1004 = vmatprep.subr.mxu0 0.0
    %1005 = vmatpush2.msra.mxu0 0.0
    %1006 = vmatprep.subr.mxu0 0.0
    %1007 = vmatpush2.msra.mxu0 0.0
    %1008 = vmatprep.subr.mxu0 0.0
    %1009 = vmatpush2.msra.mxu0 0.0
    %1010 = vmatprep.subr.mxu0 0.0
    %1011 = vmatpush2.msra.mxu0 0.0
    %1012 = vmatprep.subr.mxu0 0.0
    %1013 = vmatpush2.msra.mxu0 0.0
    %1014 = vmatprep.subr.mxu0 0.0
    %1015 = vmatpush2.msra.mxu0 0.0
    %1016 = vmatprep.subr.mxu0 0.0
    %1017 = vmatpush2.msra.mxu0 0.0
    %1018 = vmatprep.subr.mxu0 0.0
    %1019 = vmatpush2.msra.mxu0 0.0
    %1020 = vmatprep.subr.mxu0 0.0
    %1021 = vmatpush2.msra.mxu0 0.0
    %1022 = vmatprep.subr.mxu0 0.0
    %1023 = vmatpush2.msra.mxu0 0.0
    %1024 = vmatprep.mubr.f32.mxu0 0.0
    %1025 = vmatmul.mubr.f32.gmra.mxu0 %v813
    %v1026 = vpop.f32.mrf.mxu0
    %v1027 = vadd.f32 %v934, %v1026
    %v1028 = vpop.f32.mrf.mxu0
    %1029 = vmatprep.mubr.f32.mxu0 0.0
    %1030 = vmatmul.mubr.f32.gmra.mxu0 %v814
    %v1031 = vpop.f32.mrf.mxu0
    %v1032 = vadd.f32 %v939, %v1031
    %v1033 = vpop.f32.mrf.mxu0
    %1034 = vmatprep.mubr.f32.mxu0 0.0
    %1035 = vmatmul.mubr.f32.gmra.mxu0 %v815
    %v1036 = vpop.f32.mrf.mxu0
    %v1037 = vpop.f32.mrf.mxu0
    %1038 = vmatprep.mubr.f32.mxu0 0.0
    %1039 = vmatmul.mubr.f32.gmra.mxu0 %v816
    %v1040 = vpop.f32.mrf.mxu0
    %v1041 = vadd.f32 %v948, %v1040
    %v1042 = vpop.f32.mrf.mxu0
    %1043 = vmatprep.mubr.f32.mxu0 0.0
    %1044 = vmatmul.mubr.f32.gmra.mxu0 %v817
    %v1045 = vpop.f32.mrf.mxu0
    %v1046 = vadd.f32 %v953, %v1045
    %v1047 = vpop.f32.mrf.mxu0
    %1048 = vmatprep.mubr.f32.mxu0 0.0
    %1049 = vmatmul.mubr.f32.gmra.mxu0 %v818
    %v1050 = vpop.f32.mrf.mxu0
    %v1051 = vpop.f32.mrf.mxu0
    %1052 = vdwg.mxu0
    %v1053 = vld [vmem:[%s8] sm:$0x1]
    %v1055 = vlaneseq
    %v1056 = vshrl.u32 %v1055, 7
    %v1057 = vsub.s32 0, %v1056
    %v1058 = vrot.slane %v1053, %v1057
    %v1060 = vmul.f32 %v1027, %v1058
    %v1061 = vmul.f32 %v1032, %v1058
    %v1062 = vmul.f32 %v1041, %v1058
    %v1063 = vmul.f32 %v1046, %v1058
    %v1064 = vld [vmem:[%s9] sm:$0x1]
    %v1066 = vlaneseq
    %v1067 = vshrl.u32 %v1066, 7
    %v1068 = vsub.s32 0, %v1067
    %v1069 = vrot.slane %v1064, %v1068
    %v1071 = vadd.f32 %v1060, %v1069
    %v1072 = vadd.f32 %v1061, %v1069
    %v1073 = vadd.f32 %v1062, %v1069
    %v1074 = vadd.f32 %v1063, %v1069
    %v1075 = vmax.f32 %v1071, 0.0
    %v1076 = vmax.f32 %v1072, 0.0
    %v1077 = vmax.f32 %v1073, 0.0
    %v1078 = vmax.f32 %v1074, 0.0
    %1079 = vst [vmem:[#allocation13] sm:$0xff] %v1075
    %1080 = vst [vmem:[#allocation13 + $0x8] sm:$0xff] %v1076
    %s1081 = scalar_lea.vmem [#allocation13], 16
    %1082 = vst [vmem:[%s1081] sm:$0xff] %v1077
    %1083 = vst [vmem:[%s1081 + $0x8] sm:$0xff] %v1078
    // Predicated region
    $region58: #{tpu_custom_call.1} parent=1 // pred_check
      _
    $region59: #{tpu_custom_call.1} parent=1 // pred_check_branch
      %1085 = sbr.rel (0) target = $region61
    $region60: #{tpu_custom_call.1} parent=1 // pred_region
      %s1087 = ssub.s32 512, 512
      %1088 = vsyncadd [#allocation7], %s1087
      %s1089 = sshll.u32 [#allocation13], 4
      %s1090 = int_to_ptr.vmem [resolvable:$true] %s1089
      %1095 = dma.vmem_to_hbm [thread:$0]  %s1090, 512, %s10, [#allocation7], 128, 128, 8
    $region61: #{tpu_custom_call.1} parent=1 // pred_fallthru
      _
    // Predicated region
    $region62: #{tpu_custom_call.1} parent=1 // pred_check
      _
    $region63: #{tpu_custom_call.1} parent=1 // pred_check_branch
      %1097 = sbr.rel (0) target = $region65
    $region64: #{tpu_custom_call.1} parent=1 // pred_region
      %1098 = dma.done [#allocation7], 512
    $region65: #{tpu_custom_call.1} parent=1 // pred_fallthru
      _
    %1099 = vsyncpa [#allocation6], 1
    %1100 = vsyncpa [#allocation9], 1
    %1101 = vsyncpa [#allocation12], 1
    %1102 = vsyncpa [#allocation7], 1

</llo_original>
